<compile_context>
chip_gen: v6e
topology: v6e:2x2x1
jax: 0.10.0
libtpu: 0.0.40
codegen_flags: <defaults>
</compile_context>

<pallas_src>
import jax
import jax.numpy as jnp
from jax.experimental import pallas as pl
from jax.experimental.pallas import tpu as pltpu

H, W = 10, 11          # fixed by nn.LayerNorm([10, 11])
HW = H * W
LANES = 128            # lane-dense padded spatial dim (110 -> 128)
EPS = 1e-5             # PyTorch LayerNorm default eps
KD = 3                 # depth kernel size of Conv3d (3, 1, 1)


def _transition_kernel(x_ref, w_ref, b_ref, o_ref, col_ref):
    # x_ref  : (NB*C_in, D, 128)        batch-major block, lane-dense spatial dim
    # w_ref  : (NB*C_out, KD*NB*C_in)   block-diagonal (over NB batch slots) weights
    # b_ref  : (NB*C_out, 1)
    # o_ref  : (NB*C_out, D*128)        already (n, c_out, d, hw)-ordered
    # col_ref: (KD*NB*C_in, D*128)      im2col scratch, depth folded into lanes
    rows, d_len, _ = x_ref.shape
    inv_hw = 1.0 / float(HW)            # real spatial size; padded lanes are zero

    # Depth-boundary taps that are never written in the loop below must be zero.
    zero_slab = jnp.zeros((rows, LANES), jnp.float32)
    col_ref[0:rows, 0:LANES] = zero_slab                                       # kd=0 @ dout=0
    col_ref[2 * rows:3 * rows, (d_len - 1) * LANES:d_len * LANES] = zero_slab  # kd=2 @ dout=D-1

    # LayerNorm([10,11], no affine) + ReLU per depth slice, scattered into im2col.
    for d in range(d_len):                        # D is small: static unroll
        xs = x_ref[:, d, :].astype(jnp.float32)   # (rows, 128)
        mean = jnp.sum(xs, axis=-1, keepdims=True) * inv_hw
        ex2 = jnp.sum(xs * xs, axis=-1, keepdims=True) * inv_hw
        var = ex2 - mean * mean                   # biased variance
        y = jnp.maximum((xs - mean) * jax.lax.rsqrt(var + EPS), 0.0)
        # Source depth d feeds output depths d+1 (tap kd=0), d (kd=1), d-1 (kd=2).
        col_ref[rows:2 * rows, d * LANES:(d + 1) * LANES] = y
        if d + 1 < d_len:
            col_ref[0:rows, (d + 1) * LANES:(d + 2) * LANES] = y
        if d >= 1:
            col_ref[2 * rows:3 * rows, (d - 1) * LANES:d * LANES] = y

    # Conv3d(3,1,1): ONE MXU matmul per grid step, one lane-dense output slab.
    acc = jnp.dot(w_ref[...], col_ref[...], preferred_element_type=jnp.float32)
    o_ref[...] = (acc + b_ref[...]).astype(o_ref.dtype)


def _num_tensorcores():
    """2 TensorCores per chip on v7x, 1 on v5e/v6e; default to 1 if unknown."""
    try:
        kind = jax.devices()[0].device_kind.lower()
        if "v7" in kind or "7x" in kind:
            return 2
    except Exception:
        pass
    return 1


def _pick_batch_block(n, c_in, c_out, num_cores):
    """Largest batch block NB (divisor of N) giving exactly one grid step per
    TensorCore, while the fused matmul stays within one MXU tile (M, K <= 256)
    and the output block's second-minor dim is 8-aligned (required unless the
    block spans the whole batch)."""
    candidates = []
    for nb in range(1, n + 1):
        if n % nb:
            continue
        if (nb * c_out) % 8 != 0 and nb != n:
            continue                                  # out BlockSpec alignment
        steps = n // nb
        fits = (KD * nb * c_in <= 256) and (nb * c_out <= 256)
        aligned_in = (nb * c_in) % 8 == 0
        candidates.append(((fits, steps == num_cores, aligned_in, -steps), nb))
    return max(candidates)[1]


def transition_block_tem(x, weight, bias):
    """x: (N, C_in, D, 10, 11) f32; weight: (C_out, C_in, 3, 1, 1); bias: (C_out,)."""
    n, c_in, d_len, h, w = x.shape
    assert (h, w) == (H, W)
    c_out = weight.shape[0]

    nb = _pick_batch_block(n, c_in, c_out, _num_tensorcores())
    grid = n // nb

    # Lane-dense input: (N, C_in, D, HW) zero-padded to 128 lanes, batch/channel
    # merged into one row dim (no transpose -- just pad + reshape).
    x_p = jnp.pad(x.reshape(n, c_in, d_len, HW), ((0, 0),) * 3 + ((0, LANES - HW),))
    x_r = x_p.reshape(n * c_in, d_len, LANES)

    # Block-diagonal (over NB batch slots) flattened conv weight:
    #   rows ordered (nb, c_out), cols ordered (kd, nb, c_in) -- matches col layout.
    w_ = weight[:, :, :, 0, 0]                                 # (C_out, C_in, KD)
    w_bd = jnp.einsum("mn,ock->moknc", jnp.eye(nb, dtype=w_.dtype), w_)
    w_bd = w_bd.reshape(nb * c_out, KD * nb * c_in)
    b_bd = jnp.tile(bias, nb).reshape(nb * c_out, 1)

    out = pl.pallas_call(
        _transition_kernel,
        out_shape=jax.ShapeDtypeStruct((n * c_out, d_len * LANES), x.dtype),
        grid_spec=pltpu.PrefetchScalarGridSpec(
            num_scalar_prefetch=0,
            grid=(grid,),
            in_specs=[
                pl.BlockSpec((nb * c_in, d_len, LANES), lambda g: (g, 0, 0)),
                pl.BlockSpec((nb * c_out, KD * nb * c_in), lambda g: (0, 0)),
                pl.BlockSpec((nb * c_out, 1), lambda g: (0, 0)),
            ],
            out_specs=pl.BlockSpec((nb * c_out, d_len * LANES), lambda g: (g, 0)),
            scratch_shapes=[pltpu.VMEM((KD * nb * c_in, d_len * LANES), jnp.float32)],
        ),
        compiler_params=pltpu.CompilerParams(
            dimension_semantics=("parallel",)),
    )(x_r, w_bd, b_bd)

    # (N*C_out, D*128) is already (n, c_out, d, hw)-ordered: just drop the pad lanes.
    out = out.reshape(n, c_out, d_len, LANES)[..., :HW]
    return out.reshape(n, c_out, d_len, H, W)


def _reference(x, weight, bias):
    """Plain-JAX reference mirroring the PyTorch forward."""
    mean = jnp.mean(x, axis=(-2, -1), keepdims=True)
    var = jnp.mean((x - mean) ** 2, axis=(-2, -1), keepdims=True)
    y = (x - mean) / jnp.sqrt(var + EPS)
    y = jnp.maximum(y, 0.0)
    out = jax.lax.conv_general_dilated(
        y, weight,
        window_strides=(1, 1, 1),
        padding=((1, 1), (0, 0), (0, 0)),
        dimension_numbers=("NCDHW", "OIDHW", "NCDHW"),
    )
    return out + bias.reshape(1, -1, 1, 1, 1)


if __name__ == "__main__":
    key = jax.random.PRNGKey(0)
    kx, kw, kb = jax.random.split(key, 3)

    N, C_IN, C_OUT, D_LEN = 4, 4, 8, 6
    x = jax.random.normal(kx, (N, C_IN, D_LEN, H, W), dtype=jnp.float32)

    # Deterministic synthetic Conv3d parameters (shapes per nn.Conv3d(C_IN, C_OUT, (3,1,1)))
    fan_in = C_IN * KD * 1 * 1
    bound = 1.0 / (fan_in ** 0.5)
    weight = jax.random.uniform(kw, (C_OUT, C_IN, KD, 1, 1),
                                minval=-bound, maxval=bound, dtype=jnp.float32)
    bias = jax.random.uniform(kb, (C_OUT,), minval=-bound, maxval=bound,
                              dtype=jnp.float32)

    out = transition_block_tem(x, weight, bias)
    out = jax.block_until_ready(out)

    ref = _reference(x, weight, bias)
    assert out.shape == (N, C_OUT, D_LEN, H, W)
    assert jnp.allclose(out, ref, atol=1e-4, rtol=1e-4), "mismatch vs reference"

    print("KERNEL_OK")
</pallas_src>

<mosaic_0001>
module attributes {stable_mosaic.version = 11 : i64} {
  func.func @_transition_kernel(%arg0: i32, %arg1: memref<16x6x128xf32, #tpu.memory_space<vmem>>, %arg2: memref<32x48xf32, #tpu.memory_space<vmem>>, %arg3: memref<32x1xf32, #tpu.memory_space<vmem>>, %arg4: memref<32x768xf32, #tpu.memory_space<vmem>>, %arg5: memref<48x768xf32, #tpu.memory_space<vmem>>) attributes {dimension_semantics = [#tpu.dimension_semantics<parallel>], iteration_bounds = array<i64: 1>, scalar_prefetch = 0 : i64, scratch_operands = 1 : i64, tpu.core_type = #tpu.core_type<tc>, window_params = [{transform_indices = @transform_0, window_bounds = array<i64: 16, 6, 128>}, {pipeline_mode = #tpu.pipeline_mode<synchronous>, transform_indices = @transform_1, window_bounds = array<i64: 32, 48>}, {pipeline_mode = #tpu.pipeline_mode<synchronous>, transform_indices = @transform_2, window_bounds = array<i64: 32, 1>}, {transform_indices = @transform_3, window_bounds = array<i64: 32, 768>}]} {
    %cst = arith.constant 0.000000e+00 : f32
    %0 = vector.broadcast %cst : f32 to vector<16x128xf32>
    %c0 = arith.constant 0 : index
    %c0_0 = arith.constant 0 : index
    %1 = vector.load %arg5[%c0, %c0_0] : memref<48x768xf32, #tpu.memory_space<vmem>>, vector<16x128xf32>
    tpu.vector_store %arg5[%c0, %c0_0], %0 {strides = array<i32>} : memref<48x768xf32, #tpu.memory_space<vmem>>, vector<16x128xf32>,
    %c32 = arith.constant 32 : index
    %c640 = arith.constant 640 : index
    %2 = vector.load %arg5[%c32, %c640] : memref<48x768xf32, #tpu.memory_space<vmem>>, vector<16x128xf32>
    tpu.vector_store %arg5[%c32, %c640], %0 {strides = array<i32>} : memref<48x768xf32, #tpu.memory_space<vmem>>, vector<16x128xf32>,
    %c0_1 = arith.constant 0 : index
    %c0_2 = arith.constant 0 : index
    %c0_3 = arith.constant 0 : index
    %3 = vector.load %arg1[%c0_1, %c0_2, %c0_3] : memref<16x6x128xf32, #tpu.memory_space<vmem>>, vector<16x1x128xf32>
    %4 = vector.shape_cast %3 : vector<16x1x128xf32> to vector<16x128xf32>
    %cst_4 = arith.constant dense<0.000000e+00> : vector<16xf32>
    %5 = vector.multi_reduction <add>, %4, %cst_4 [1] : vector<16x128xf32> to vector<16xf32>
    %6 = vector.shape_cast %5 : vector<16xf32> to vector<16x1xf32>
    %cst_5 = arith.constant 0.0090909088 : f32
    %7 = vector.broadcast %cst_5 : f32 to vector<16x1xf32>
    %8 = arith.mulf %6, %7 : vector<16x1xf32>
    %9 = arith.mulf %4, %4 : vector<16x128xf32>
    %cst_6 = arith.constant dense<0.000000e+00> : vector<16xf32>
    %10 = vector.multi_reduction <add>, %9, %cst_6 [1] : vector<16x128xf32> to vector<16xf32>
    %11 = vector.shape_cast %10 : vector<16xf32> to vector<16x1xf32>
    %cst_7 = arith.constant 0.0090909088 : f32
    %12 = vector.broadcast %cst_7 : f32 to vector<16x1xf32>
    %13 = arith.mulf %11, %12 : vector<16x1xf32>
    %14 = arith.mulf %8, %8 : vector<16x1xf32>
    %15 = arith.subf %13, %14 : vector<16x1xf32>
    %16 = vector.broadcast %8 : vector<16x1xf32> to vector<16x128xf32>
    %17 = arith.subf %4, %16 : vector<16x128xf32>
    %cst_8 = arith.constant 9.99999974E-6 : f32
    %18 = vector.broadcast %cst_8 : f32 to vector<16x1xf32>
    %19 = arith.addf %15, %18 : vector<16x1xf32>
    %20 = math.rsqrt %19 : vector<16x1xf32>
    %21 = vector.broadcast %20 : vector<16x1xf32> to vector<16x128xf32>
    %22 = arith.mulf %17, %21 : vector<16x128xf32>
    %cst_9 = arith.constant 0.000000e+00 : f32
    %23 = vector.broadcast %cst_9 : f32 to vector<16x128xf32>
    %24 = arith.maximumf %22, %23 : vector<16x128xf32>
    %c16 = arith.constant 16 : index
    %c0_10 = arith.constant 0 : index
    %25 = vector.load %arg5[%c16, %c0_10] : memref<48x768xf32, #tpu.memory_space<vmem>>, vector<16x128xf32>
    tpu.vector_store %arg5[%c16, %c0_10], %24 {strides = array<i32>} : memref<48x768xf32, #tpu.memory_space<vmem>>, vector<16x128xf32>,
    %c0_11 = arith.constant 0 : index
    %c128 = arith.constant 128 : index
    %26 = vector.load %arg5[%c0_11, %c128] : memref<48x768xf32, #tpu.memory_space<vmem>>, vector<16x128xf32>
    tpu.vector_store %arg5[%c0_11, %c128], %24 {strides = array<i32>} : memref<48x768xf32, #tpu.memory_space<vmem>>, vector<16x128xf32>,
    %c0_12 = arith.constant 0 : index
    %c1 = arith.constant 1 : index
    %c0_13 = arith.constant 0 : index
    %27 = vector.load %arg1[%c0_12, %c1, %c0_13] : memref<16x6x128xf32, #tpu.memory_space<vmem>>, vector<16x1x128xf32>
    %28 = vector.shape_cast %27 : vector<16x1x128xf32> to vector<16x128xf32>
    %cst_14 = arith.constant dense<0.000000e+00> : vector<16xf32>
    %29 = vector.multi_reduction <add>, %28, %cst_14 [1] : vector<16x128xf32> to vector<16xf32>
    %30 = vector.shape_cast %29 : vector<16xf32> to vector<16x1xf32>
    %cst_15 = arith.constant 0.0090909088 : f32
    %31 = vector.broadcast %cst_15 : f32 to vector<16x1xf32>
    %32 = arith.mulf %30, %31 : vector<16x1xf32>
    %33 = arith.mulf %28, %28 : vector<16x128xf32>
    %cst_16 = arith.constant dense<0.000000e+00> : vector<16xf32>
    %34 = vector.multi_reduction <add>, %33, %cst_16 [1] : vector<16x128xf32> to vector<16xf32>
    %35 = vector.shape_cast %34 : vector<16xf32> to vector<16x1xf32>
    %cst_17 = arith.constant 0.0090909088 : f32
    %36 = vector.broadcast %cst_17 : f32 to vector<16x1xf32>
    %37 = arith.mulf %35, %36 : vector<16x1xf32>
    %38 = arith.mulf %32, %32 : vector<16x1xf32>
    %39 = arith.subf %37, %38 : vector<16x1xf32>
    %40 = vector.broadcast %32 : vector<16x1xf32> to vector<16x128xf32>
    %41 = arith.subf %28, %40 : vector<16x128xf32>
    %cst_18 = arith.constant 9.99999974E-6 : f32
    %42 = vector.broadcast %cst_18 : f32 to vector<16x1xf32>
    %43 = arith.addf %39, %42 : vector<16x1xf32>
    %44 = math.rsqrt %43 : vector<16x1xf32>
    %45 = vector.broadcast %44 : vector<16x1xf32> to vector<16x128xf32>
    %46 = arith.mulf %41, %45 : vector<16x128xf32>
    %cst_19 = arith.constant 0.000000e+00 : f32
    %47 = vector.broadcast %cst_19 : f32 to vector<16x128xf32>
    %48 = arith.maximumf %46, %47 : vector<16x128xf32>
    %c16_20 = arith.constant 16 : index
    %c128_21 = arith.constant 128 : index
    %49 = vector.load %arg5[%c16_20, %c128_21] : memref<48x768xf32, #tpu.memory_space<vmem>>, vector<16x128xf32>
    tpu.vector_store %arg5[%c16_20, %c128_21], %48 {strides = array<i32>} : memref<48x768xf32, #tpu.memory_space<vmem>>, vector<16x128xf32>,
    %c0_22 = arith.constant 0 : index
    %c256 = arith.constant 256 : index
    %50 = vector.load %arg5[%c0_22, %c256] : memref<48x768xf32, #tpu.memory_space<vmem>>, vector<16x128xf32>
    tpu.vector_store %arg5[%c0_22, %c256], %48 {strides = array<i32>} : memref<48x768xf32, #tpu.memory_space<vmem>>, vector<16x128xf32>,
    %c32_23 = arith.constant 32 : index
    %c0_24 = arith.constant 0 : index
    %51 = vector.load %arg5[%c32_23, %c0_24] : memref<48x768xf32, #tpu.memory_space<vmem>>, vector<16x128xf32>
    tpu.vector_store %arg5[%c32_23, %c0_24], %48 {strides = array<i32>} : memref<48x768xf32, #tpu.memory_space<vmem>>, vector<16x128xf32>,
    %c0_25 = arith.constant 0 : index
    %c2 = arith.constant 2 : index
    %c0_26 = arith.constant 0 : index
    %52 = vector.load %arg1[%c0_25, %c2, %c0_26] : memref<16x6x128xf32, #tpu.memory_space<vmem>>, vector<16x1x128xf32>
    %53 = vector.shape_cast %52 : vector<16x1x128xf32> to vector<16x128xf32>
    %cst_27 = arith.constant dense<0.000000e+00> : vector<16xf32>
    %54 = vector.multi_reduction <add>, %53, %cst_27 [1] : vector<16x128xf32> to vector<16xf32>
    %55 = vector.shape_cast %54 : vector<16xf32> to vector<16x1xf32>
    %cst_28 = arith.constant 0.0090909088 : f32
    %56 = vector.broadcast %cst_28 : f32 to vector<16x1xf32>
    %57 = arith.mulf %55, %56 : vector<16x1xf32>
    %58 = arith.mulf %53, %53 : vector<16x128xf32>
    %cst_29 = arith.constant dense<0.000000e+00> : vector<16xf32>
    %59 = vector.multi_reduction <add>, %58, %cst_29 [1] : vector<16x128xf32> to vector<16xf32>
    %60 = vector.shape_cast %59 : vector<16xf32> to vector<16x1xf32>
    %cst_30 = arith.constant 0.0090909088 : f32
    %61 = vector.broadcast %cst_30 : f32 to vector<16x1xf32>
    %62 = arith.mulf %60, %61 : vector<16x1xf32>
    %63 = arith.mulf %57, %57 : vector<16x1xf32>
    %64 = arith.subf %62, %63 : vector<16x1xf32>
    %65 = vector.broadcast %57 : vector<16x1xf32> to vector<16x128xf32>
    %66 = arith.subf %53, %65 : vector<16x128xf32>
    %cst_31 = arith.constant 9.99999974E-6 : f32
    %67 = vector.broadcast %cst_31 : f32 to vector<16x1xf32>
    %68 = arith.addf %64, %67 : vector<16x1xf32>
    %69 = math.rsqrt %68 : vector<16x1xf32>
    %70 = vector.broadcast %69 : vector<16x1xf32> to vector<16x128xf32>
    %71 = arith.mulf %66, %70 : vector<16x128xf32>
    %cst_32 = arith.constant 0.000000e+00 : f32
    %72 = vector.broadcast %cst_32 : f32 to vector<16x128xf32>
    %73 = arith.maximumf %71, %72 : vector<16x128xf32>
    %c16_33 = arith.constant 16 : index
    %c256_34 = arith.constant 256 : index
    %74 = vector.load %arg5[%c16_33, %c256_34] : memref<48x768xf32, #tpu.memory_space<vmem>>, vector<16x128xf32>
    tpu.vector_store %arg5[%c16_33, %c256_34], %73 {strides = array<i32>} : memref<48x768xf32, #tpu.memory_space<vmem>>, vector<16x128xf32>,
    %c0_35 = arith.constant 0 : index
    %c384 = arith.constant 384 : index
    %75 = vector.load %arg5[%c0_35, %c384] : memref<48x768xf32, #tpu.memory_space<vmem>>, vector<16x128xf32>
    tpu.vector_store %arg5[%c0_35, %c384], %73 {strides = array<i32>} : memref<48x768xf32, #tpu.memory_space<vmem>>, vector<16x128xf32>,
    %c32_36 = arith.constant 32 : index
    %c128_37 = arith.constant 128 : index
    %76 = vector.load %arg5[%c32_36, %c128_37] : memref<48x768xf32, #tpu.memory_space<vmem>>, vector<16x128xf32>
    tpu.vector_store %arg5[%c32_36, %c128_37], %73 {strides = array<i32>} : memref<48x768xf32, #tpu.memory_space<vmem>>, vector<16x128xf32>,
    %c0_38 = arith.constant 0 : index
    %c3 = arith.constant 3 : index
    %c0_39 = arith.constant 0 : index
    %77 = vector.load %arg1[%c0_38, %c3, %c0_39] : memref<16x6x128xf32, #tpu.memory_space<vmem>>, vector<16x1x128xf32>
    %78 = vector.shape_cast %77 : vector<16x1x128xf32> to vector<16x128xf32>
    %cst_40 = arith.constant dense<0.000000e+00> : vector<16xf32>
    %79 = vector.multi_reduction <add>, %78, %cst_40 [1] : vector<16x128xf32> to vector<16xf32>
    %80 = vector.shape_cast %79 : vector<16xf32> to vector<16x1xf32>
    %cst_41 = arith.constant 0.0090909088 : f32
    %81 = vector.broadcast %cst_41 : f32 to vector<16x1xf32>
    %82 = arith.mulf %80, %81 : vector<16x1xf32>
    %83 = arith.mulf %78, %78 : vector<16x128xf32>
    %cst_42 = arith.constant dense<0.000000e+00> : vector<16xf32>
    %84 = vector.multi_reduction <add>, %83, %cst_42 [1] : vector<16x128xf32> to vector<16xf32>
    %85 = vector.shape_cast %84 : vector<16xf32> to vector<16x1xf32>
    %cst_43 = arith.constant 0.0090909088 : f32
    %86 = vector.broadcast %cst_43 : f32 to vector<16x1xf32>
    %87 = arith.mulf %85, %86 : vector<16x1xf32>
    %88 = arith.mulf %82, %82 : vector<16x1xf32>
    %89 = arith.subf %87, %88 : vector<16x1xf32>
    %90 = vector.broadcast %82 : vector<16x1xf32> to vector<16x128xf32>
    %91 = arith.subf %78, %90 : vector<16x128xf32>
    %cst_44 = arith.constant 9.99999974E-6 : f32
    %92 = vector.broadcast %cst_44 : f32 to vector<16x1xf32>
    %93 = arith.addf %89, %92 : vector<16x1xf32>
    %94 = math.rsqrt %93 : vector<16x1xf32>
    %95 = vector.broadcast %94 : vector<16x1xf32> to vector<16x128xf32>
    %96 = arith.mulf %91, %95 : vector<16x128xf32>
    %cst_45 = arith.constant 0.000000e+00 : f32
    %97 = vector.broadcast %cst_45 : f32 to vector<16x128xf32>
    %98 = arith.maximumf %96, %97 : vector<16x128xf32>
    %c16_46 = arith.constant 16 : index
    %c384_47 = arith.constant 384 : index
    %99 = vector.load %arg5[%c16_46, %c384_47] : memref<48x768xf32, #tpu.memory_space<vmem>>, vector<16x128xf32>
    tpu.vector_store %arg5[%c16_46, %c384_47], %98 {strides = array<i32>} : memref<48x768xf32, #tpu.memory_space<vmem>>, vector<16x128xf32>,
    %c0_48 = arith.constant 0 : index
    %c512 = arith.constant 512 : index
    %100 = vector.load %arg5[%c0_48, %c512] : memref<48x768xf32, #tpu.memory_space<vmem>>, vector<16x128xf32>
    tpu.vector_store %arg5[%c0_48, %c512], %98 {strides = array<i32>} : memref<48x768xf32, #tpu.memory_space<vmem>>, vector<16x128xf32>,
    %c32_49 = arith.constant 32 : index
    %c256_50 = arith.constant 256 : index
    %101 = vector.load %arg5[%c32_49, %c256_50] : memref<48x768xf32, #tpu.memory_space<vmem>>, vector<16x128xf32>
    tpu.vector_store %arg5[%c32_49, %c256_50], %98 {strides = array<i32>} : memref<48x768xf32, #tpu.memory_space<vmem>>, vector<16x128xf32>,
    %c0_51 = arith.constant 0 : index
    %c4 = arith.constant 4 : index
    %c0_52 = arith.constant 0 : index
    %102 = vector.load %arg1[%c0_51, %c4, %c0_52] : memref<16x6x128xf32, #tpu.memory_space<vmem>>, vector<16x1x128xf32>
    %103 = vector.shape_cast %102 : vector<16x1x128xf32> to vector<16x128xf32>
    %cst_53 = arith.constant dense<0.000000e+00> : vector<16xf32>
    %104 = vector.multi_reduction <add>, %103, %cst_53 [1] : vector<16x128xf32> to vector<16xf32>
    %105 = vector.shape_cast %104 : vector<16xf32> to vector<16x1xf32>
    %cst_54 = arith.constant 0.0090909088 : f32
    %106 = vector.broadcast %cst_54 : f32 to vector<16x1xf32>
    %107 = arith.mulf %105, %106 : vector<16x1xf32>
    %108 = arith.mulf %103, %103 : vector<16x128xf32>
    %cst_55 = arith.constant dense<0.000000e+00> : vector<16xf32>
    %109 = vector.multi_reduction <add>, %108, %cst_55 [1] : vector<16x128xf32> to vector<16xf32>
    %110 = vector.shape_cast %109 : vector<16xf32> to vector<16x1xf32>
    %cst_56 = arith.constant 0.0090909088 : f32
    %111 = vector.broadcast %cst_56 : f32 to vector<16x1xf32>
    %112 = arith.mulf %110, %111 : vector<16x1xf32>
    %113 = arith.mulf %107, %107 : vector<16x1xf32>
    %114 = arith.subf %112, %113 : vector<16x1xf32>
    %115 = vector.broadcast %107 : vector<16x1xf32> to vector<16x128xf32>
    %116 = arith.subf %103, %115 : vector<16x128xf32>
    %cst_57 = arith.constant 9.99999974E-6 : f32
    %117 = vector.broadcast %cst_57 : f32 to vector<16x1xf32>
    %118 = arith.addf %114, %117 : vector<16x1xf32>
    %119 = math.rsqrt %118 : vector<16x1xf32>
    %120 = vector.broadcast %119 : vector<16x1xf32> to vector<16x128xf32>
    %121 = arith.mulf %116, %120 : vector<16x128xf32>
    %cst_58 = arith.constant 0.000000e+00 : f32
    %122 = vector.broadcast %cst_58 : f32 to vector<16x128xf32>
    %123 = arith.maximumf %121, %122 : vector<16x128xf32>
    %c16_59 = arith.constant 16 : index
    %c512_60 = arith.constant 512 : index
    %124 = vector.load %arg5[%c16_59, %c512_60] : memref<48x768xf32, #tpu.memory_space<vmem>>, vector<16x128xf32>
    tpu.vector_store %arg5[%c16_59, %c512_60], %123 {strides = array<i32>} : memref<48x768xf32, #tpu.memory_space<vmem>>, vector<16x128xf32>,
    %c0_61 = arith.constant 0 : index
    %c640_62 = arith.constant 640 : index
    %125 = vector.load %arg5[%c0_61, %c640_62] : memref<48x768xf32, #tpu.memory_space<vmem>>, vector<16x128xf32>
    tpu.vector_store %arg5[%c0_61, %c640_62], %123 {strides = array<i32>} : memref<48x768xf32, #tpu.memory_space<vmem>>, vector<16x128xf32>,
    %c32_63 = arith.constant 32 : index
    %c384_64 = arith.constant 384 : index
    %126 = vector.load %arg5[%c32_63, %c384_64] : memref<48x768xf32, #tpu.memory_space<vmem>>, vector<16x128xf32>
    tpu.vector_store %arg5[%c32_63, %c384_64], %123 {strides = array<i32>} : memref<48x768xf32, #tpu.memory_space<vmem>>, vector<16x128xf32>,
    %c0_65 = arith.constant 0 : index
    %c5 = arith.constant 5 : index
    %c0_66 = arith.constant 0 : index
    %127 = vector.load %arg1[%c0_65, %c5, %c0_66] : memref<16x6x128xf32, #tpu.memory_space<vmem>>, vector<16x1x128xf32>
    %128 = vector.shape_cast %127 : vector<16x1x128xf32> to vector<16x128xf32>
    %cst_67 = arith.constant dense<0.000000e+00> : vector<16xf32>
    %129 = vector.multi_reduction <add>, %128, %cst_67 [1] : vector<16x128xf32> to vector<16xf32>
    %130 = vector.shape_cast %129 : vector<16xf32> to vector<16x1xf32>
    %cst_68 = arith.constant 0.0090909088 : f32
    %131 = vector.broadcast %cst_68 : f32 to vector<16x1xf32>
    %132 = arith.mulf %130, %131 : vector<16x1xf32>
    %133 = arith.mulf %128, %128 : vector<16x128xf32>
    %cst_69 = arith.constant dense<0.000000e+00> : vector<16xf32>
    %134 = vector.multi_reduction <add>, %133, %cst_69 [1] : vector<16x128xf32> to vector<16xf32>
    %135 = vector.shape_cast %134 : vector<16xf32> to vector<16x1xf32>
    %cst_70 = arith.constant 0.0090909088 : f32
    %136 = vector.broadcast %cst_70 : f32 to vector<16x1xf32>
    %137 = arith.mulf %135, %136 : vector<16x1xf32>
    %138 = arith.mulf %132, %132 : vector<16x1xf32>
    %139 = arith.subf %137, %138 : vector<16x1xf32>
    %140 = vector.broadcast %132 : vector<16x1xf32> to vector<16x128xf32>
    %141 = arith.subf %128, %140 : vector<16x128xf32>
    %cst_71 = arith.constant 9.99999974E-6 : f32
    %142 = vector.broadcast %cst_71 : f32 to vector<16x1xf32>
    %143 = arith.addf %139, %142 : vector<16x1xf32>
    %144 = math.rsqrt %143 : vector<16x1xf32>
    %145 = vector.broadcast %144 : vector<16x1xf32> to vector<16x128xf32>
    %146 = arith.mulf %141, %145 : vector<16x128xf32>
    %cst_72 = arith.constant 0.000000e+00 : f32
    %147 = vector.broadcast %cst_72 : f32 to vector<16x128xf32>
    %148 = arith.maximumf %146, %147 : vector<16x128xf32>
    %c16_73 = arith.constant 16 : index
    %c640_74 = arith.constant 640 : index
    %149 = vector.load %arg5[%c16_73, %c640_74] : memref<48x768xf32, #tpu.memory_space<vmem>>, vector<16x128xf32>
    tpu.vector_store %arg5[%c16_73, %c640_74], %148 {strides = array<i32>} : memref<48x768xf32, #tpu.memory_space<vmem>>, vector<16x128xf32>,
    %c32_75 = arith.constant 32 : index
    %c512_76 = arith.constant 512 : index
    %150 = vector.load %arg5[%c32_75, %c512_76] : memref<48x768xf32, #tpu.memory_space<vmem>>, vector<16x128xf32>
    tpu.vector_store %arg5[%c32_75, %c512_76], %148 {strides = array<i32>} : memref<48x768xf32, #tpu.memory_space<vmem>>, vector<16x128xf32>,
    %c0_77 = arith.constant 0 : index
    %c0_78 = arith.constant 0 : index
    %151 = vector.load %arg2[%c0_77, %c0_78] : memref<32x48xf32, #tpu.memory_space<vmem>>, vector<32x48xf32>
    %c0_79 = arith.constant 0 : index
    %c0_80 = arith.constant 0 : index
    %152 = vector.load %arg5[%c0_79, %c0_80] : memref<48x768xf32, #tpu.memory_space<vmem>>, vector<48x768xf32>
    %cst_81 = arith.constant dense<0.000000e+00> : vector<32x768xf32>
    %153 = tpu.matmul %151, %152, %cst_81 {dimension_numbers = #tpu.dot_dimension_numbers<[1], [0], [0], [1], [0, 0, 1, 1], [], []>} : vector<32x48xf32>, vector<48x768xf32>, vector<32x768xf32> -> vector<32x768xf32>
    %c0_82 = arith.constant 0 : index
    %c0_83 = arith.constant 0 : index
    %154 = vector.load %arg3[%c0_82, %c0_83] : memref<32x1xf32, #tpu.memory_space<vmem>>, vector<32x1xf32>
    %155 = vector.broadcast %154 : vector<32x1xf32> to vector<32x768xf32>
    %156 = arith.addf %153, %155 : vector<32x768xf32>
    %c0_84 = arith.constant 0 : index
    %c0_85 = arith.constant 0 : index
    %157 = vector.load %arg4[%c0_84, %c0_85] : memref<32x768xf32, #tpu.memory_space<vmem>>, vector<32x768xf32>
    tpu.vector_store %arg4[%c0_84, %c0_85], %156 {strides = array<i32>} : memref<32x768xf32, #tpu.memory_space<vmem>>, vector<32x768xf32>,
    return
  }
  func.func @transform_0(%arg0: i32) -> (i32, i32, i32) {
    %c0_i32 = arith.constant 0 : i32
    %c0_i32_0 = arith.constant 0 : i32
    %c0_i32_1 = arith.constant 0 : i32
    return %arg0, %c0_i32, %c0_i32_0 : i32, i32, i32
  }
  func.func @transform_1(%arg0: i32) -> (i32, i32) {
    %c0_i32 = arith.constant 0 : i32
    %c0_i32_0 = arith.constant 0 : i32
    %c0_i32_1 = arith.constant 0 : i32
    return %c0_i32, %c0_i32_0 : i32, i32
  }
  func.func @transform_2(%arg0: i32) -> (i32, i32) {
    %c0_i32 = arith.constant 0 : i32
    %c0_i32_0 = arith.constant 0 : i32
    %c0_i32_1 = arith.constant 0 : i32
    return %c0_i32, %c0_i32_0 : i32, i32
  }
  func.func @transform_3(%arg0: i32) -> (i32, i32) {
    %c0_i32 = arith.constant 0 : i32
    %c0_i32_0 = arith.constant 0 : i32
    return %arg0, %c0_i32 : i32, i32
  }
}

</mosaic_0001>

<llo_original>
// kernel: tpu_custom_call.1
$region0: #{tpu_custom_call.1}
  #allocation0 [shape = 'u32[]', space=smem, size = 0x4, offset = 0x4, fixed_abs, tag = 'smem constant byte address 0x4 - core index']
  #allocation1 [shape = 'u32[144,128]{1,0:T(1,128)}', space=vmem, size = 0x12000, scoped, tag = 'internal scratch']
  #allocation2 [shape = 'f32[48,768]{1,0:T(8,128)}', space=vmem, size = 0x24000, scoped, tag = 'scratch operand']
  %s0 = inlined_call_operand.vmem [shape: f32[16,6,128], index: 0, kind: input, shape index: {}]
  %s1 = inlined_call_operand.vmem [shape: f32[32,48], index: 1, kind: input, shape index: {}]
  %s2 = inlined_call_operand.vmem [shape: f32[32,1], index: 2, kind: input, shape index: {}]
  %s3 = inlined_call_operand.hbm [shape: f32[32,768], index: 3, kind: output, shape index: {}]
  %s4 = sld [smem:[#allocation0]]
  $region22: #{tpu_custom_call.1} parent=0
    _
  %s6 = ssub.s32 1, %s4
  %s7 = scalar_select 0, %s6, %s4
  $region1: #{tpu_custom_call.1} parent=0
    #allocation3 [shape = 'u8[98304]{0}', space=vmem, size = 0x18000, scoped, tag = 'output window, operand 0, single buffered']
    #allocation4 [shape = 's32[1]{0}', space=sflag, size = 0x4, scoped, tag = 'scoped memory for tpu_custom_call.1']
    %8 = vsyncpa [#allocation4], 0
    // Predicated region
    $region2: #{tpu_custom_call.1} parent=1 // pred_check
      _
    $region3: #{tpu_custom_call.1} parent=1 // pred_check_branch
      %10 = sbr.rel (0) target = $region5
    $region4: #{tpu_custom_call.1} parent=1 // pred_region
      _
    $region5: #{tpu_custom_call.1} parent=1 // pred_fallthru
      _
    // Predicated region
    $region6: #{tpu_custom_call.1} parent=1 // pred_check
      _
    $region7: #{tpu_custom_call.1} parent=1 // pred_check_branch
      %12 = sbr.rel (0) target = $region9
    $region8: #{tpu_custom_call.1} parent=1 // pred_region
      _
    $region9: #{tpu_custom_call.1} parent=1 // pred_fallthru
      _
    // Predicated region
    $region10: #{tpu_custom_call.1} parent=1 // pred_check
      _
    $region11: #{tpu_custom_call.1} parent=1 // pred_check_branch
      %14 = sbr.rel (0) target = $region13
    $region12: #{tpu_custom_call.1} parent=1 // pred_region
      _
    $region13: #{tpu_custom_call.1} parent=1 // pred_fallthru
      _
    %15 = vst [vmem:[#allocation2] sm:$0xff] 0.0
    %16 = vst [vmem:[#allocation2 + $0x30] sm:$0xff] 0.0
    %17 = vst [vmem:[#allocation2 + $0xe8] sm:$0xff] 0.0
    %18 = vst [vmem:[#allocation2 + $0x118] sm:$0xff] 0.0
    %v19 = vld [vmem:[%s0] sm:$0x1]
    %v20 = vld [vmem:[%s0 + $0x8] sm:$0x1]
    %v21 = vld [vmem:[%s0 + $0x10] sm:$0x1]
    %v22 = vld [vmem:[%s0 + $0x18] sm:$0x1]
    %v23 = vld [vmem:[%s0 + $0x20] sm:$0x1]
    %v24 = vld [vmem:[%s0 + $0x28] sm:$0x1]
    %v25 = vld [vmem:[%s0 + $0x30] sm:$0x1]
    %v26 = vld [vmem:[%s0 + $0x38] sm:$0x1]
    %v27 = vld [vmem:[%s0 + $0x40] sm:$0x1]
    %v28 = vld [vmem:[%s0 + $0x48] sm:$0x1]
    %v29 = vld [vmem:[%s0 + $0x50] sm:$0x1]
    %v30 = vld [vmem:[%s0 + $0x58] sm:$0x1]
    %v31 = vld [vmem:[%s0 + $0x60] sm:$0x1]
    %v32 = vld [vmem:[%s0 + $0x68] sm:$0x1]
    %v33 = vld [vmem:[%s0 + $0x70] sm:$0x1]
    %v34 = vld [vmem:[%s0 + $0x78] sm:$0x1]
    %v51 = vrot.slane %v20, 7
    %vm52 = vcmask 1041409
    %v53 = vsel %vm52, %v51, %v19
    %v54 = vrot.slane %v21, 6
    %vm55 = vcmask 1042434
    %v56 = vsel %vm55, %v54, %v53
    %v57 = vrot.slane %v22, 5
    %vm58 = vcmask 1043459
    %v59 = vsel %vm58, %v57, %v56
    %v60 = vrot.slane %v23, 4
    %vm61 = vcmask 1044484
    %v62 = vsel %vm61, %v60, %v59
    %v63 = vrot.slane %v24, 3
    %vm64 = vcmask 1045509
    %v65 = vsel %vm64, %v63, %v62
    %v66 = vrot.slane %v25, 2
    %vm67 = vcmask 1046534
    %v68 = vsel %vm67, %v66, %v65
    %v69 = vrot.slane %v26, 1
    %vm70 = vcmask 1047559
    %v71 = vsel %vm70, %v69, %v68
    %v72 = vrot.slane %v28, 7
    %v73 = vsel %vm52, %v72, %v27
    %v74 = vrot.slane %v29, 6
    %v75 = vsel %vm55, %v74, %v73
    %v76 = vrot.slane %v30, 5
    %v77 = vsel %vm58, %v76, %v75
    %v78 = vrot.slane %v31, 4
    %v79 = vsel %vm61, %v78, %v77
    %v80 = vrot.slane %v32, 3
    %v81 = vsel %vm64, %v80, %v79
    %v82 = vrot.slane %v33, 2
    %v83 = vsel %vm67, %v82, %v81
    %v84 = vrot.slane %v34, 1
    %v85 = vsel %vm70, %v84, %v83
    %88 = vadd.xlane.f32.xlu0 %v71
    %v89 = vpop.xlane.xlu0 %88
    %90 = vadd.xlane.f32.xlu0 %v85
    %v91 = vpop.xlane.xlu0 %90
    %v92 = vmul.f32 %v89, 0.009090909
    %v93 = vmul.f32 %v91, 0.009090909
    %v94 = vmul.f32 %v19, %v19
    %v95 = vmul.f32 %v20, %v20
    %v96 = vmul.f32 %v21, %v21
    %v97 = vmul.f32 %v22, %v22
    %v98 = vmul.f32 %v23, %v23
    %v99 = vmul.f32 %v24, %v24
    %v100 = vmul.f32 %v25, %v25
    %v101 = vmul.f32 %v26, %v26
    %v102 = vmul.f32 %v27, %v27
    %v103 = vmul.f32 %v28, %v28
    %v104 = vmul.f32 %v29, %v29
    %v105 = vmul.f32 %v30, %v30
    %v106 = vmul.f32 %v31, %v31
    %v107 = vmul.f32 %v32, %v32
    %v108 = vmul.f32 %v33, %v33
    %v109 = vmul.f32 %v34, %v34
    %v126 = vrot.slane %v95, 7
    %v127 = vsel %vm52, %v126, %v94
    %v128 = vrot.slane %v96, 6
    %v129 = vsel %vm55, %v128, %v127
    %v130 = vrot.slane %v97, 5
    %v131 = vsel %vm58, %v130, %v129
    %v132 = vrot.slane %v98, 4
    %v133 = vsel %vm61, %v132, %v131
    %v134 = vrot.slane %v99, 3
    %v135 = vsel %vm64, %v134, %v133
    %v136 = vrot.slane %v100, 2
    %v137 = vsel %vm67, %v136, %v135
    %v138 = vrot.slane %v101, 1
    %v139 = vsel %vm70, %v138, %v137
    %v140 = vrot.slane %v103, 7
    %v141 = vsel %vm52, %v140, %v102
    %v142 = vrot.slane %v104, 6
    %v143 = vsel %vm55, %v142, %v141
    %v144 = vrot.slane %v105, 5
    %v145 = vsel %vm58, %v144, %v143
    %v146 = vrot.slane %v106, 4
    %v147 = vsel %vm61, %v146, %v145
    %v148 = vrot.slane %v107, 3
    %v149 = vsel %vm64, %v148, %v147
    %v150 = vrot.slane %v108, 2
    %v151 = vsel %vm67, %v150, %v149
    %v152 = vrot.slane %v109, 1
    %v153 = vsel %vm70, %v152, %v151
    %156 = vadd.xlane.f32.xlu0 %v139
    %v157 = vpop.xlane.xlu0 %156
    %158 = vadd.xlane.f32.xlu0 %v153
    %v159 = vpop.xlane.xlu0 %158
    %v160 = vmul.f32 %v157, 0.009090909
    %v161 = vmul.f32 %v159, 0.009090909
    %v162 = vmul.f32 %v92, %v92
    %v163 = vmul.f32 %v93, %v93
    %v164 = vsub.f32 %v160, %v162
    %v165 = vsub.f32 %v161, %v163
    %v168 = vrot.slane %v92, 1
    %v169 = vrot.slane %v92, 2
    %v170 = vrot.slane %v92, 3
    %v171 = vrot.slane %v92, 4
    %v172 = vrot.slane %v92, 5
    %v173 = vrot.slane %v92, 6
    %v174 = vrot.slane %v92, 7
    %v175 = vrot.slane %v93, 1
    %v176 = vrot.slane %v93, 2
    %v177 = vrot.slane %v93, 3
    %v178 = vrot.slane %v93, 4
    %v179 = vrot.slane %v93, 5
    %v180 = vrot.slane %v93, 6
    %v181 = vrot.slane %v93, 7
    %v198 = vsub.f32 %v19, %v92
    %v199 = vsub.f32 %v20, %v168
    %v200 = vsub.f32 %v21, %v169
    %v201 = vsub.f32 %v22, %v170
    %v202 = vsub.f32 %v23, %v171
    %v203 = vsub.f32 %v24, %v172
    %v204 = vsub.f32 %v25, %v173
    %v205 = vsub.f32 %v26, %v174
    %v206 = vsub.f32 %v27, %v93
    %v207 = vsub.f32 %v28, %v175
    %v208 = vsub.f32 %v29, %v176
    %v209 = vsub.f32 %v30, %v177
    %v210 = vsub.f32 %v31, %v178
    %v211 = vsub.f32 %v32, %v179
    %v212 = vsub.f32 %v33, %v180
    %v213 = vsub.f32 %v34, %v181
    %v214 = vadd.f32 %v164, 1e-05
    %v215 = vadd.f32 %v165, 1e-05
    %v216 = vrsqrt.pop %v214
    %v217 = vrsqrt.pop %v215
    %v220 = vrot.slane %v216, 1
    %v221 = vrot.slane %v216, 2
    %v222 = vrot.slane %v216, 3
    %v223 = vrot.slane %v216, 4
    %v224 = vrot.slane %v216, 5
    %v225 = vrot.slane %v216, 6
    %v226 = vrot.slane %v216, 7
    %v227 = vrot.slane %v217, 1
    %v228 = vrot.slane %v217, 2
    %v229 = vrot.slane %v217, 3
    %v230 = vrot.slane %v217, 4
    %v231 = vrot.slane %v217, 5
    %v232 = vrot.slane %v217, 6
    %v233 = vrot.slane %v217, 7
    %v250 = vmul.f32 %v198, %v216
    %v251 = vmul.f32 %v199, %v220
    %v252 = vmul.f32 %v200, %v221
    %v253 = vmul.f32 %v201, %v222
    %v254 = vmul.f32 %v202, %v223
    %v255 = vmul.f32 %v203, %v224
    %v256 = vmul.f32 %v204, %v225
    %v257 = vmul.f32 %v205, %v226
    %v258 = vmul.f32 %v206, %v217
    %v259 = vmul.f32 %v207, %v227
    %v260 = vmul.f32 %v208, %v228
    %v261 = vmul.f32 %v209, %v229
    %v262 = vmul.f32 %v210, %v230
    %v263 = vmul.f32 %v211, %v231
    %v264 = vmul.f32 %v212, %v232
    %v265 = vmul.f32 %v213, %v233
    %v266 = vmax.f32 %v250, 0.0
    %v267 = vmax.f32 %v251, 0.0
    %v268 = vmax.f32 %v252, 0.0
    %v269 = vmax.f32 %v253, 0.0
    %v270 = vmax.f32 %v254, 0.0
    %v271 = vmax.f32 %v255, 0.0
    %v272 = vmax.f32 %v256, 0.0
    %v273 = vmax.f32 %v257, 0.0
    %v274 = vmax.f32 %v258, 0.0
    %v275 = vmax.f32 %v259, 0.0
    %v276 = vmax.f32 %v260, 0.0
    %v277 = vmax.f32 %v261, 0.0
    %v278 = vmax.f32 %v262, 0.0
    %v279 = vmax.f32 %v263, 0.0
    %v280 = vmax.f32 %v264, 0.0
    %v281 = vmax.f32 %v265, 0.0
    %v298 = vrot.slane %v267, 7
    %v299 = vsel %vm52, %v298, %v266
    %v300 = vrot.slane %v268, 6
    %v301 = vsel %vm55, %v300, %v299
    %v302 = vrot.slane %v269, 5
    %v303 = vsel %vm58, %v302, %v301
    %v304 = vrot.slane %v270, 4
    %v305 = vsel %vm61, %v304, %v303
    %v306 = vrot.slane %v271, 3
    %v307 = vsel %vm64, %v306, %v305
    %v308 = vrot.slane %v272, 2
    %v309 = vsel %vm67, %v308, %v307
    %v310 = vrot.slane %v273, 1
    %v311 = vsel %vm70, %v310, %v309
    %v312 = vrot.slane %v275, 7
    %v313 = vsel %vm52, %v312, %v274
    %v314 = vrot.slane %v276, 6
    %v315 = vsel %vm55, %v314, %v313
    %v316 = vrot.slane %v277, 5
    %v317 = vsel %vm58, %v316, %v315
    %v318 = vrot.slane %v278, 4
    %v319 = vsel %vm61, %v318, %v317
    %v320 = vrot.slane %v279, 3
    %v321 = vsel %vm64, %v320, %v319
    %v322 = vrot.slane %v280, 2
    %v323 = vsel %vm67, %v322, %v321
    %v324 = vrot.slane %v281, 1
    %v325 = vsel %vm70, %v324, %v323
    %328 = vst [vmem:[#allocation2 + $0x60] sm:$0xff] %v311
    %329 = vst [vmem:[#allocation2 + $0x90] sm:$0xff] %v325
    %330 = vst [vmem:[#allocation2 + $0x8] sm:$0xff] %v311
    %331 = vst [vmem:[#allocation2 + $0x38] sm:$0xff] %v325
    %v332 = vld [vmem:[%s0 + $0x1] sm:$0x1]
    %v333 = vld [vmem:[%s0 + $0x9] sm:$0x1]
    %v334 = vld [vmem:[%s0 + $0x11] sm:$0x1]
    %v335 = vld [vmem:[%s0 + $0x19] sm:$0x1]
    %v336 = vld [vmem:[%s0 + $0x21] sm:$0x1]
    %v337 = vld [vmem:[%s0 + $0x29] sm:$0x1]
    %v338 = vld [vmem:[%s0 + $0x31] sm:$0x1]
    %v339 = vld [vmem:[%s0 + $0x39] sm:$0x1]
    %v340 = vld [vmem:[%s0 + $0x41] sm:$0x1]
    %v341 = vld [vmem:[%s0 + $0x49] sm:$0x1]
    %v342 = vld [vmem:[%s0 + $0x51] sm:$0x1]
    %v343 = vld [vmem:[%s0 + $0x59] sm:$0x1]
    %v344 = vld [vmem:[%s0 + $0x61] sm:$0x1]
    %v345 = vld [vmem:[%s0 + $0x69] sm:$0x1]
    %v346 = vld [vmem:[%s0 + $0x71] sm:$0x1]
    %v347 = vld [vmem:[%s0 + $0x79] sm:$0x1]
    %v364 = vrot.slane %v333, 7
    %v365 = vsel %vm52, %v364, %v332
    %v366 = vrot.slane %v334, 6
    %v367 = vsel %vm55, %v366, %v365
    %v368 = vrot.slane %v335, 5
    %v369 = vsel %vm58, %v368, %v367
    %v370 = vrot.slane %v336, 4
    %v371 = vsel %vm61, %v370, %v369
    %v372 = vrot.slane %v337, 3
    %v373 = vsel %vm64, %v372, %v371
    %v374 = vrot.slane %v338, 2
    %v375 = vsel %vm67, %v374, %v373
    %v376 = vrot.slane %v339, 1
    %v377 = vsel %vm70, %v376, %v375
    %v378 = vrot.slane %v341, 7
    %v379 = vsel %vm52, %v378, %v340
    %v380 = vrot.slane %v342, 6
    %v381 = vsel %vm55, %v380, %v379
    %v382 = vrot.slane %v343, 5
    %v383 = vsel %vm58, %v382, %v381
    %v384 = vrot.slane %v344, 4
    %v385 = vsel %vm61, %v384, %v383
    %v386 = vrot.slane %v345, 3
    %v387 = vsel %vm64, %v386, %v385
    %v388 = vrot.slane %v346, 2
    %v389 = vsel %vm67, %v388, %v387
    %v390 = vrot.slane %v347, 1
    %v391 = vsel %vm70, %v390, %v389
    %394 = vadd.xlane.f32.xlu0 %v377
    %v395 = vpop.xlane.xlu0 %394
    %396 = vadd.xlane.f32.xlu0 %v391
    %v397 = vpop.xlane.xlu0 %396
    %v398 = vmul.f32 %v395, 0.009090909
    %v399 = vmul.f32 %v397, 0.009090909
    %v400 = vmul.f32 %v332, %v332
    %v401 = vmul.f32 %v333, %v333
    %v402 = vmul.f32 %v334, %v334
    %v403 = vmul.f32 %v335, %v335
    %v404 = vmul.f32 %v336, %v336
    %v405 = vmul.f32 %v337, %v337
    %v406 = vmul.f32 %v338, %v338
    %v407 = vmul.f32 %v339, %v339
    %v408 = vmul.f32 %v340, %v340
    %v409 = vmul.f32 %v341, %v341
    %v410 = vmul.f32 %v342, %v342
    %v411 = vmul.f32 %v343, %v343
    %v412 = vmul.f32 %v344, %v344
    %v413 = vmul.f32 %v345, %v345
    %v414 = vmul.f32 %v346, %v346
    %v415 = vmul.f32 %v347, %v347
    %v432 = vrot.slane %v401, 7
    %v433 = vsel %vm52, %v432, %v400
    %v434 = vrot.slane %v402, 6
    %v435 = vsel %vm55, %v434, %v433
    %v436 = vrot.slane %v403, 5
    %v437 = vsel %vm58, %v436, %v435
    %v438 = vrot.slane %v404, 4
    %v439 = vsel %vm61, %v438, %v437
    %v440 = vrot.slane %v405, 3
    %v441 = vsel %vm64, %v440, %v439
    %v442 = vrot.slane %v406, 2
    %v443 = vsel %vm67, %v442, %v441
    %v444 = vrot.slane %v407, 1
    %v445 = vsel %vm70, %v444, %v443
    %v446 = vrot.slane %v409, 7
    %v447 = vsel %vm52, %v446, %v408
    %v448 = vrot.slane %v410, 6
    %v449 = vsel %vm55, %v448, %v447
    %v450 = vrot.slane %v411, 5
    %v451 = vsel %vm58, %v450, %v449
    %v452 = vrot.slane %v412, 4
    %v453 = vsel %vm61, %v452, %v451
    %v454 = vrot.slane %v413, 3
    %v455 = vsel %vm64, %v454, %v453
    %v456 = vrot.slane %v414, 2
    %v457 = vsel %vm67, %v456, %v455
    %v458 = vrot.slane %v415, 1
    %v459 = vsel %vm70, %v458, %v457
    %462 = vadd.xlane.f32.xlu0 %v445
    %v463 = vpop.xlane.xlu0 %462
    %464 = vadd.xlane.f32.xlu0 %v459
    %v465 = vpop.xlane.xlu0 %464
    %v466 = vmul.f32 %v463, 0.009090909
    %v467 = vmul.f32 %v465, 0.009090909
    %v468 = vmul.f32 %v398, %v398
    %v469 = vmul.f32 %v399, %v399
    %v470 = vsub.f32 %v466, %v468
    %v471 = vsub.f32 %v467, %v469
    %v474 = vrot.slane %v398, 1
    %v475 = vrot.slane %v398, 2
    %v476 = vrot.slane %v398, 3
    %v477 = vrot.slane %v398, 4
    %v478 = vrot.slane %v398, 5
    %v479 = vrot.slane %v398, 6
    %v480 = vrot.slane %v398, 7
    %v481 = vrot.slane %v399, 1
    %v482 = vrot.slane %v399, 2
    %v483 = vrot.slane %v399, 3
    %v484 = vrot.slane %v399, 4
    %v485 = vrot.slane %v399, 5
    %v486 = vrot.slane %v399, 6
    %v487 = vrot.slane %v399, 7
    %v504 = vsub.f32 %v332, %v398
    %v505 = vsub.f32 %v333, %v474
    %v506 = vsub.f32 %v334, %v475
    %v507 = vsub.f32 %v335, %v476
    %v508 = vsub.f32 %v336, %v477
    %v509 = vsub.f32 %v337, %v478
    %v510 = vsub.f32 %v338, %v479
    %v511 = vsub.f32 %v339, %v480
    %v512 = vsub.f32 %v340, %v399
    %v513 = vsub.f32 %v341, %v481
    %v514 = vsub.f32 %v342, %v482
    %v515 = vsub.f32 %v343, %v483
    %v516 = vsub.f32 %v344, %v484
    %v517 = vsub.f32 %v345, %v485
    %v518 = vsub.f32 %v346, %v486
    %v519 = vsub.f32 %v347, %v487
    %v520 = vadd.f32 %v470, 1e-05
    %v521 = vadd.f32 %v471, 1e-05
    %v522 = vrsqrt.pop %v520
    %v523 = vrsqrt.pop %v521
    %v526 = vrot.slane %v522, 1
    %v527 = vrot.slane %v522, 2
    %v528 = vrot.slane %v522, 3
    %v529 = vrot.slane %v522, 4
    %v530 = vrot.slane %v522, 5
    %v531 = vrot.slane %v522, 6
    %v532 = vrot.slane %v522, 7
    %v533 = vrot.slane %v523, 1
    %v534 = vrot.slane %v523, 2
    %v535 = vrot.slane %v523, 3
    %v536 = vrot.slane %v523, 4
    %v537 = vrot.slane %v523, 5
    %v538 = vrot.slane %v523, 6
    %v539 = vrot.slane %v523, 7
    %v556 = vmul.f32 %v504, %v522
    %v557 = vmul.f32 %v505, %v526
    %v558 = vmul.f32 %v506, %v527
    %v559 = vmul.f32 %v507, %v528
    %v560 = vmul.f32 %v508, %v529
    %v561 = vmul.f32 %v509, %v530
    %v562 = vmul.f32 %v510, %v531
    %v563 = vmul.f32 %v511, %v532
    %v564 = vmul.f32 %v512, %v523
    %v565 = vmul.f32 %v513, %v533
    %v566 = vmul.f32 %v514, %v534
    %v567 = vmul.f32 %v515, %v535
    %v568 = vmul.f32 %v516, %v536
    %v569 = vmul.f32 %v517, %v537
    %v570 = vmul.f32 %v518, %v538
    %v571 = vmul.f32 %v519, %v539
    %v572 = vmax.f32 %v556, 0.0
    %v573 = vmax.f32 %v557, 0.0
    %v574 = vmax.f32 %v558, 0.0
    %v575 = vmax.f32 %v559, 0.0
    %v576 = vmax.f32 %v560, 0.0
    %v577 = vmax.f32 %v561, 0.0
    %v578 = vmax.f32 %v562, 0.0
    %v579 = vmax.f32 %v563, 0.0
    %v580 = vmax.f32 %v564, 0.0
    %v581 = vmax.f32 %v565, 0.0
    %v582 = vmax.f32 %v566, 0.0
    %v583 = vmax.f32 %v567, 0.0
    %v584 = vmax.f32 %v568, 0.0
    %v585 = vmax.f32 %v569, 0.0
    %v586 = vmax.f32 %v570, 0.0
    %v587 = vmax.f32 %v571, 0.0
    %v604 = vrot.slane %v573, 7
    %v605 = vsel %vm52, %v604, %v572
    %v606 = vrot.slane %v574, 6
    %v607 = vsel %vm55, %v606, %v605
    %v608 = vrot.slane %v575, 5
    %v609 = vsel %vm58, %v608, %v607
    %v610 = vrot.slane %v576, 4
    %v611 = vsel %vm61, %v610, %v609
    %v612 = vrot.slane %v577, 3
    %v613 = vsel %vm64, %v612, %v611
    %v614 = vrot.slane %v578, 2
    %v615 = vsel %vm67, %v614, %v613
    %v616 = vrot.slane %v579, 1
    %v617 = vsel %vm70, %v616, %v615
    %v618 = vrot.slane %v581, 7
    %v619 = vsel %vm52, %v618, %v580
    %v620 = vrot.slane %v582, 6
    %v621 = vsel %vm55, %v620, %v619
    %v622 = vrot.slane %v583, 5
    %v623 = vsel %vm58, %v622, %v621
    %v624 = vrot.slane %v584, 4
    %v625 = vsel %vm61, %v624, %v623
    %v626 = vrot.slane %v585, 3
    %v627 = vsel %vm64, %v626, %v625
    %v628 = vrot.slane %v586, 2
    %v629 = vsel %vm67, %v628, %v627
    %v630 = vrot.slane %v587, 1
    %v631 = vsel %vm70, %v630, %v629
    %634 = vst [vmem:[#allocation2 + $0x68] sm:$0xff] %v617
    %635 = vst [vmem:[#allocation2 + $0x98] sm:$0xff] %v631
    %636 = vst [vmem:[#allocation2 + $0x10] sm:$0xff] %v617
    %637 = vst [vmem:[#allocation2 + $0x40] sm:$0xff] %v631
    %638 = vst [vmem:[#allocation2 + $0xc0] sm:$0xff] %v617
    %639 = vst [vmem:[#allocation2 + $0xf0] sm:$0xff] %v631
    %v640 = vld [vmem:[%s0 + $0x2] sm:$0x1]
    %v641 = vld [vmem:[%s0 + $0xa] sm:$0x1]
    %v642 = vld [vmem:[%s0 + $0x12] sm:$0x1]
    %v643 = vld [vmem:[%s0 + $0x1a] sm:$0x1]
    %v644 = vld [vmem:[%s0 + $0x22] sm:$0x1]
    %v645 = vld [vmem:[%s0 + $0x2a] sm:$0x1]
    %v646 = vld [vmem:[%s0 + $0x32] sm:$0x1]
    %v647 = vld [vmem:[%s0 + $0x3a] sm:$0x1]
    %v648 = vld [vmem:[%s0 + $0x42] sm:$0x1]
    %v649 = vld [vmem:[%s0 + $0x4a] sm:$0x1]
    %v650 = vld [vmem:[%s0 + $0x52] sm:$0x1]
    %v651 = vld [vmem:[%s0 + $0x5a] sm:$0x1]
    %v652 = vld [vmem:[%s0 + $0x62] sm:$0x1]
    %v653 = vld [vmem:[%s0 + $0x6a] sm:$0x1]
    %v654 = vld [vmem:[%s0 + $0x72] sm:$0x1]
    %v655 = vld [vmem:[%s0 + $0x7a] sm:$0x1]
    %v672 = vrot.slane %v641, 7
    %v673 = vsel %vm52, %v672, %v640
    %v674 = vrot.slane %v642, 6
    %v675 = vsel %vm55, %v674, %v673
    %v676 = vrot.slane %v643, 5
    %v677 = vsel %vm58, %v676, %v675
    %v678 = vrot.slane %v644, 4
    %v679 = vsel %vm61, %v678, %v677
    %v680 = vrot.slane %v645, 3
    %v681 = vsel %vm64, %v680, %v679
    %v682 = vrot.slane %v646, 2
    %v683 = vsel %vm67, %v682, %v681
    %v684 = vrot.slane %v647, 1
    %v685 = vsel %vm70, %v684, %v683
    %v686 = vrot.slane %v649, 7
    %v687 = vsel %vm52, %v686, %v648
    %v688 = vrot.slane %v650, 6
    %v689 = vsel %vm55, %v688, %v687
    %v690 = vrot.slane %v651, 5
    %v691 = vsel %vm58, %v690, %v689
    %v692 = vrot.slane %v652, 4
    %v693 = vsel %vm61, %v692, %v691
    %v694 = vrot.slane %v653, 3
    %v695 = vsel %vm64, %v694, %v693
    %v696 = vrot.slane %v654, 2
    %v697 = vsel %vm67, %v696, %v695
    %v698 = vrot.slane %v655, 1
    %v699 = vsel %vm70, %v698, %v697
    %702 = vadd.xlane.f32.xlu0 %v685
    %v703 = vpop.xlane.xlu0 %702
    %704 = vadd.xlane.f32.xlu0 %v699
    %v705 = vpop.xlane.xlu0 %704
    %v706 = vmul.f32 %v703, 0.009090909
    %v707 = vmul.f32 %v705, 0.009090909
    %v708 = vmul.f32 %v640, %v640
    %v709 = vmul.f32 %v641, %v641
    %v710 = vmul.f32 %v642, %v642
    %v711 = vmul.f32 %v643, %v643
    %v712 = vmul.f32 %v644, %v644
    %v713 = vmul.f32 %v645, %v645
    %v714 = vmul.f32 %v646, %v646
    %v715 = vmul.f32 %v647, %v647
    %v716 = vmul.f32 %v648, %v648
    %v717 = vmul.f32 %v649, %v649
    %v718 = vmul.f32 %v650, %v650
    %v719 = vmul.f32 %v651, %v651
    %v720 = vmul.f32 %v652, %v652
    %v721 = vmul.f32 %v653, %v653
    %v722 = vmul.f32 %v654, %v654
    %v723 = vmul.f32 %v655, %v655
    %v740 = vrot.slane %v709, 7
    %v741 = vsel %vm52, %v740, %v708
    %v742 = vrot.slane %v710, 6
    %v743 = vsel %vm55, %v742, %v741
    %v744 = vrot.slane %v711, 5
    %v745 = vsel %vm58, %v744, %v743
    %v746 = vrot.slane %v712, 4
    %v747 = vsel %vm61, %v746, %v745
    %v748 = vrot.slane %v713, 3
    %v749 = vsel %vm64, %v748, %v747
    %v750 = vrot.slane %v714, 2
    %v751 = vsel %vm67, %v750, %v749
    %v752 = vrot.slane %v715, 1
    %v753 = vsel %vm70, %v752, %v751
    %v754 = vrot.slane %v717, 7
    %v755 = vsel %vm52, %v754, %v716
    %v756 = vrot.slane %v718, 6
    %v757 = vsel %vm55, %v756, %v755
    %v758 = vrot.slane %v719, 5
    %v759 = vsel %vm58, %v758, %v757
    %v760 = vrot.slane %v720, 4
    %v761 = vsel %vm61, %v760, %v759
    %v762 = vrot.slane %v721, 3
    %v763 = vsel %vm64, %v762, %v761
    %v764 = vrot.slane %v722, 2
    %v765 = vsel %vm67, %v764, %v763
    %v766 = vrot.slane %v723, 1
    %v767 = vsel %vm70, %v766, %v765
    %770 = vadd.xlane.f32.xlu0 %v753
    %v771 = vpop.xlane.xlu0 %770
    %772 = vadd.xlane.f32.xlu0 %v767
    %v773 = vpop.xlane.xlu0 %772
    %v774 = vmul.f32 %v771, 0.009090909
    %v775 = vmul.f32 %v773, 0.009090909
    %v776 = vmul.f32 %v706, %v706
    %v777 = vmul.f32 %v707, %v707
    %v778 = vsub.f32 %v774, %v776
    %v779 = vsub.f32 %v775, %v777
    %v782 = vrot.slane %v706, 1
    %v783 = vrot.slane %v706, 2
    %v784 = vrot.slane %v706, 3
    %v785 = vrot.slane %v706, 4
    %v786 = vrot.slane %v706, 5
    %v787 = vrot.slane %v706, 6
    %v788 = vrot.slane %v706, 7
    %v789 = vrot.slane %v707, 1
    %v790 = vrot.slane %v707, 2
    %v791 = vrot.slane %v707, 3
    %v792 = vrot.slane %v707, 4
    %v793 = vrot.slane %v707, 5
    %v794 = vrot.slane %v707, 6
    %v795 = vrot.slane %v707, 7
    %v812 = vsub.f32 %v640, %v706
    %v813 = vsub.f32 %v641, %v782
    %v814 = vsub.f32 %v642, %v783
    %v815 = vsub.f32 %v643, %v784
    %v816 = vsub.f32 %v644, %v785
    %v817 = vsub.f32 %v645, %v786
    %v818 = vsub.f32 %v646, %v787
    %v819 = vsub.f32 %v647, %v788
    %v820 = vsub.f32 %v648, %v707
    %v821 = vsub.f32 %v649, %v789
    %v822 = vsub.f32 %v650, %v790
    %v823 = vsub.f32 %v651, %v791
    %v824 = vsub.f32 %v652, %v792
    %v825 = vsub.f32 %v653, %v793
    %v826 = vsub.f32 %v654, %v794
    %v827 = vsub.f32 %v655, %v795
    %v828 = vadd.f32 %v778, 1e-05
    %v829 = vadd.f32 %v779, 1e-05
    %v830 = vrsqrt.pop %v828
    %v831 = vrsqrt.pop %v829
    %v834 = vrot.slane %v830, 1
    %v835 = vrot.slane %v830, 2
    %v836 = vrot.slane %v830, 3
    %v837 = vrot.slane %v830, 4
    %v838 = vrot.slane %v830, 5
    %v839 = vrot.slane %v830, 6
    %v840 = vrot.slane %v830, 7
    %v841 = vrot.slane %v831, 1
    %v842 = vrot.slane %v831, 2
    %v843 = vrot.slane %v831, 3
    %v844 = vrot.slane %v831, 4
    %v845 = vrot.slane %v831, 5
    %v846 = vrot.slane %v831, 6
    %v847 = vrot.slane %v831, 7
    %v864 = vmul.f32 %v812, %v830
    %v865 = vmul.f32 %v813, %v834
    %v866 = vmul.f32 %v814, %v835
    %v867 = vmul.f32 %v815, %v836
    %v868 = vmul.f32 %v816, %v837
    %v869 = vmul.f32 %v817, %v838
    %v870 = vmul.f32 %v818, %v839
    %v871 = vmul.f32 %v819, %v840
    %v872 = vmul.f32 %v820, %v831
    %v873 = vmul.f32 %v821, %v841
    %v874 = vmul.f32 %v822, %v842
    %v875 = vmul.f32 %v823, %v843
    %v876 = vmul.f32 %v824, %v844
    %v877 = vmul.f32 %v825, %v845
    %v878 = vmul.f32 %v826, %v846
    %v879 = vmul.f32 %v827, %v847
    %v880 = vmax.f32 %v864, 0.0
    %v881 = vmax.f32 %v865, 0.0
    %v882 = vmax.f32 %v866, 0.0
    %v883 = vmax.f32 %v867, 0.0
    %v884 = vmax.f32 %v868, 0.0
    %v885 = vmax.f32 %v869, 0.0
    %v886 = vmax.f32 %v870, 0.0
    %v887 = vmax.f32 %v871, 0.0
    %v888 = vmax.f32 %v872, 0.0
    %v889 = vmax.f32 %v873, 0.0
    %v890 = vmax.f32 %v874, 0.0
    %v891 = vmax.f32 %v875, 0.0
    %v892 = vmax.f32 %v876, 0.0
    %v893 = vmax.f32 %v877, 0.0
    %v894 = vmax.f32 %v878, 0.0
    %v895 = vmax.f32 %v879, 0.0
    %v912 = vrot.slane %v881, 7
    %v913 = vsel %vm52, %v912, %v880
    %v914 = vrot.slane %v882, 6
    %v915 = vsel %vm55, %v914, %v913
    %v916 = vrot.slane %v883, 5
    %v917 = vsel %vm58, %v916, %v915
    %v918 = vrot.slane %v884, 4
    %v919 = vsel %vm61, %v918, %v917
    %v920 = vrot.slane %v885, 3
    %v921 = vsel %vm64, %v920, %v919
    %v922 = vrot.slane %v886, 2
    %v923 = vsel %vm67, %v922, %v921
    %v924 = vrot.slane %v887, 1
    %v925 = vsel %vm70, %v924, %v923
    %v926 = vrot.slane %v889, 7
    %v927 = vsel %vm52, %v926, %v888
    %v928 = vrot.slane %v890, 6
    %v929 = vsel %vm55, %v928, %v927
    %v930 = vrot.slane %v891, 5
    %v931 = vsel %vm58, %v930, %v929
    %v932 = vrot.slane %v892, 4
    %v933 = vsel %vm61, %v932, %v931
    %v934 = vrot.slane %v893, 3
    %v935 = vsel %vm64, %v934, %v933
    %v936 = vrot.slane %v894, 2
    %v937 = vsel %vm67, %v936, %v935
    %v938 = vrot.slane %v895, 1
    %v939 = vsel %vm70, %v938, %v937
    %942 = vst [vmem:[#allocation2 + $0x70] sm:$0xff] %v925
    %943 = vst [vmem:[#allocation2 + $0xa0] sm:$0xff] %v939
    %944 = vst [vmem:[#allocation2 + $0x18] sm:$0xff] %v925
    %945 = vst [vmem:[#allocation2 + $0x48] sm:$0xff] %v939
    %946 = vst [vmem:[#allocation2 + $0xc8] sm:$0xff] %v925
    %947 = vst [vmem:[#allocation2 + $0xf8] sm:$0xff] %v939
    %v948 = vld [vmem:[%s0 + $0x3] sm:$0x1]
    %v949 = vld [vmem:[%s0 + $0xb] sm:$0x1]
    %v950 = vld [vmem:[%s0 + $0x13] sm:$0x1]
    %v951 = vld [vmem:[%s0 + $0x1b] sm:$0x1]
    %v952 = vld [vmem:[%s0 + $0x23] sm:$0x1]
    %v953 = vld [vmem:[%s0 + $0x2b] sm:$0x1]
    %v954 = vld [vmem:[%s0 + $0x33] sm:$0x1]
    %v955 = vld [vmem:[%s0 + $0x3b] sm:$0x1]
    %v956 = vld [vmem:[%s0 + $0x43] sm:$0x1]
    %v957 = vld [vmem:[%s0 + $0x4b] sm:$0x1]
    %v958 = vld [vmem:[%s0 + $0x53] sm:$0x1]
    %v959 = vld [vmem:[%s0 + $0x5b] sm:$0x1]
    %v960 = vld [vmem:[%s0 + $0x63] sm:$0x1]
    %v961 = vld [vmem:[%s0 + $0x6b] sm:$0x1]
    %v962 = vld [vmem:[%s0 + $0x73] sm:$0x1]
    %v963 = vld [vmem:[%s0 + $0x7b] sm:$0x1]
    %v980 = vrot.slane %v949, 7
    %v981 = vsel %vm52, %v980, %v948
    %v982 = vrot.slane %v950, 6
    %v983 = vsel %vm55, %v982, %v981
    %v984 = vrot.slane %v951, 5
    %v985 = vsel %vm58, %v984, %v983
    %v986 = vrot.slane %v952, 4
    %v987 = vsel %vm61, %v986, %v985
    %v988 = vrot.slane %v953, 3
    %v989 = vsel %vm64, %v988, %v987
    %v990 = vrot.slane %v954, 2
    %v991 = vsel %vm67, %v990, %v989
    %v992 = vrot.slane %v955, 1
    %v993 = vsel %vm70, %v992, %v991
    %v994 = vrot.slane %v957, 7
    %v995 = vsel %vm52, %v994, %v956
    %v996 = vrot.slane %v958, 6
    %v997 = vsel %vm55, %v996, %v995
    %v998 = vrot.slane %v959, 5
    %v999 = vsel %vm58, %v998, %v997
    %v1000 = vrot.slane %v960, 4
    %v1001 = vsel %vm61, %v1000, %v999
    %v1002 = vrot.slane %v961, 3
    %v1003 = vsel %vm64, %v1002, %v1001
    %v1004 = vrot.slane %v962, 2
    %v1005 = vsel %vm67, %v1004, %v1003
    %v1006 = vrot.slane %v963, 1
    %v1007 = vsel %vm70, %v1006, %v1005
    %1010 = vadd.xlane.f32.xlu0 %v993
    %v1011 = vpop.xlane.xlu0 %1010
    %1012 = vadd.xlane.f32.xlu0 %v1007
    %v1013 = vpop.xlane.xlu0 %1012
    %v1014 = vmul.f32 %v1011, 0.009090909
    %v1015 = vmul.f32 %v1013, 0.009090909
    %v1016 = vmul.f32 %v948, %v948
    %v1017 = vmul.f32 %v949, %v949
    %v1018 = vmul.f32 %v950, %v950
    %v1019 = vmul.f32 %v951, %v951
    %v1020 = vmul.f32 %v952, %v952
    %v1021 = vmul.f32 %v953, %v953
    %v1022 = vmul.f32 %v954, %v954
    %v1023 = vmul.f32 %v955, %v955
    %v1024 = vmul.f32 %v956, %v956
    %v1025 = vmul.f32 %v957, %v957
    %v1026 = vmul.f32 %v958, %v958
    %v1027 = vmul.f32 %v959, %v959
    %v1028 = vmul.f32 %v960, %v960
    %v1029 = vmul.f32 %v961, %v961
    %v1030 = vmul.f32 %v962, %v962
    %v1031 = vmul.f32 %v963, %v963
    %v1048 = vrot.slane %v1017, 7
    %v1049 = vsel %vm52, %v1048, %v1016
    %v1050 = vrot.slane %v1018, 6
    %v1051 = vsel %vm55, %v1050, %v1049
    %v1052 = vrot.slane %v1019, 5
    %v1053 = vsel %vm58, %v1052, %v1051
    %v1054 = vrot.slane %v1020, 4
    %v1055 = vsel %vm61, %v1054, %v1053
    %v1056 = vrot.slane %v1021, 3
    %v1057 = vsel %vm64, %v1056, %v1055
    %v1058 = vrot.slane %v1022, 2
    %v1059 = vsel %vm67, %v1058, %v1057
    %v1060 = vrot.slane %v1023, 1
    %v1061 = vsel %vm70, %v1060, %v1059
    %v1062 = vrot.slane %v1025, 7
    %v1063 = vsel %vm52, %v1062, %v1024
    %v1064 = vrot.slane %v1026, 6
    %v1065 = vsel %vm55, %v1064, %v1063
    %v1066 = vrot.slane %v1027, 5
    %v1067 = vsel %vm58, %v1066, %v1065
    %v1068 = vrot.slane %v1028, 4
    %v1069 = vsel %vm61, %v1068, %v1067
    %v1070 = vrot.slane %v1029, 3
    %v1071 = vsel %vm64, %v1070, %v1069
    %v1072 = vrot.slane %v1030, 2
    %v1073 = vsel %vm67, %v1072, %v1071
    %v1074 = vrot.slane %v1031, 1
    %v1075 = vsel %vm70, %v1074, %v1073
    %1078 = vadd.xlane.f32.xlu0 %v1061
    %v1079 = vpop.xlane.xlu0 %1078
    %1080 = vadd.xlane.f32.xlu0 %v1075
    %v1081 = vpop.xlane.xlu0 %1080
    %v1082 = vmul.f32 %v1079, 0.009090909
    %v1083 = vmul.f32 %v1081, 0.009090909
    %v1084 = vmul.f32 %v1014, %v1014
    %v1085 = vmul.f32 %v1015, %v1015
    %v1086 = vsub.f32 %v1082, %v1084
    %v1087 = vsub.f32 %v1083, %v1085
    %v1090 = vrot.slane %v1014, 1
    %v1091 = vrot.slane %v1014, 2
    %v1092 = vrot.slane %v1014, 3
    %v1093 = vrot.slane %v1014, 4
    %v1094 = vrot.slane %v1014, 5
    %v1095 = vrot.slane %v1014, 6
    %v1096 = vrot.slane %v1014, 7
    %v1097 = vrot.slane %v1015, 1
    %v1098 = vrot.slane %v1015, 2
    %v1099 = vrot.slane %v1015, 3
    %v1100 = vrot.slane %v1015, 4
    %v1101 = vrot.slane %v1015, 5
    %v1102 = vrot.slane %v1015, 6
    %v1103 = vrot.slane %v1015, 7
    %v1120 = vsub.f32 %v948, %v1014
    %v1121 = vsub.f32 %v949, %v1090
    %v1122 = vsub.f32 %v950, %v1091
    %v1123 = vsub.f32 %v951, %v1092
    %v1124 = vsub.f32 %v952, %v1093
    %v1125 = vsub.f32 %v953, %v1094
    %v1126 = vsub.f32 %v954, %v1095
    %v1127 = vsub.f32 %v955, %v1096
    %v1128 = vsub.f32 %v956, %v1015
    %v1129 = vsub.f32 %v957, %v1097
    %v1130 = vsub.f32 %v958, %v1098
    %v1131 = vsub.f32 %v959, %v1099
    %v1132 = vsub.f32 %v960, %v1100
    %v1133 = vsub.f32 %v961, %v1101
    %v1134 = vsub.f32 %v962, %v1102
    %v1135 = vsub.f32 %v963, %v1103
    %v1136 = vadd.f32 %v1086, 1e-05
    %v1137 = vadd.f32 %v1087, 1e-05
    %v1138 = vrsqrt.pop %v1136
    %v1139 = vrsqrt.pop %v1137
    %v1142 = vrot.slane %v1138, 1
    %v1143 = vrot.slane %v1138, 2
    %v1144 = vrot.slane %v1138, 3
    %v1145 = vrot.slane %v1138, 4
    %v1146 = vrot.slane %v1138, 5
    %v1147 = vrot.slane %v1138, 6
    %v1148 = vrot.slane %v1138, 7
    %v1149 = vrot.slane %v1139, 1
    %v1150 = vrot.slane %v1139, 2
    %v1151 = vrot.slane %v1139, 3
    %v1152 = vrot.slane %v1139, 4
    %v1153 = vrot.slane %v1139, 5
    %v1154 = vrot.slane %v1139, 6
    %v1155 = vrot.slane %v1139, 7
    %v1172 = vmul.f32 %v1120, %v1138
    %v1173 = vmul.f32 %v1121, %v1142
    %v1174 = vmul.f32 %v1122, %v1143
    %v1175 = vmul.f32 %v1123, %v1144
    %v1176 = vmul.f32 %v1124, %v1145
    %v1177 = vmul.f32 %v1125, %v1146
    %v1178 = vmul.f32 %v1126, %v1147
    %v1179 = vmul.f32 %v1127, %v1148
    %v1180 = vmul.f32 %v1128, %v1139
    %v1181 = vmul.f32 %v1129, %v1149
    %v1182 = vmul.f32 %v1130, %v1150
    %v1183 = vmul.f32 %v1131, %v1151
    %v1184 = vmul.f32 %v1132, %v1152
    %v1185 = vmul.f32 %v1133, %v1153
    %v1186 = vmul.f32 %v1134, %v1154
    %v1187 = vmul.f32 %v1135, %v1155
    %v1188 = vmax.f32 %v1172, 0.0
    %v1189 = vmax.f32 %v1173, 0.0
    %v1190 = vmax.f32 %v1174, 0.0
    %v1191 = vmax.f32 %v1175, 0.0
    %v1192 = vmax.f32 %v1176, 0.0
    %v1193 = vmax.f32 %v1177, 0.0
    %v1194 = vmax.f32 %v1178, 0.0
    %v1195 = vmax.f32 %v1179, 0.0
    %v1196 = vmax.f32 %v1180, 0.0
    %v1197 = vmax.f32 %v1181, 0.0
    %v1198 = vmax.f32 %v1182, 0.0
    %v1199 = vmax.f32 %v1183, 0.0
    %v1200 = vmax.f32 %v1184, 0.0
    %v1201 = vmax.f32 %v1185, 0.0
    %v1202 = vmax.f32 %v1186, 0.0
    %v1203 = vmax.f32 %v1187, 0.0
    %v1220 = vrot.slane %v1189, 7
    %v1221 = vsel %vm52, %v1220, %v1188
    %v1222 = vrot.slane %v1190, 6
    %v1223 = vsel %vm55, %v1222, %v1221
    %v1224 = vrot.slane %v1191, 5
    %v1225 = vsel %vm58, %v1224, %v1223
    %v1226 = vrot.slane %v1192, 4
    %v1227 = vsel %vm61, %v1226, %v1225
    %v1228 = vrot.slane %v1193, 3
    %v1229 = vsel %vm64, %v1228, %v1227
    %v1230 = vrot.slane %v1194, 2
    %v1231 = vsel %vm67, %v1230, %v1229
    %v1232 = vrot.slane %v1195, 1
    %v1233 = vsel %vm70, %v1232, %v1231
    %v1234 = vrot.slane %v1197, 7
    %v1235 = vsel %vm52, %v1234, %v1196
    %v1236 = vrot.slane %v1198, 6
    %v1237 = vsel %vm55, %v1236, %v1235
    %v1238 = vrot.slane %v1199, 5
    %v1239 = vsel %vm58, %v1238, %v1237
    %v1240 = vrot.slane %v1200, 4
    %v1241 = vsel %vm61, %v1240, %v1239
    %v1242 = vrot.slane %v1201, 3
    %v1243 = vsel %vm64, %v1242, %v1241
    %v1244 = vrot.slane %v1202, 2
    %v1245 = vsel %vm67, %v1244, %v1243
    %v1246 = vrot.slane %v1203, 1
    %v1247 = vsel %vm70, %v1246, %v1245
    %1250 = vst [vmem:[#allocation2 + $0x78] sm:$0xff] %v1233
    %1251 = vst [vmem:[#allocation2 + $0xa8] sm:$0xff] %v1247
    %1252 = vst [vmem:[#allocation2 + $0x20] sm:$0xff] %v1233
    %1253 = vst [vmem:[#allocation2 + $0x50] sm:$0xff] %v1247
    %1254 = vst [vmem:[#allocation2 + $0xd0] sm:$0xff] %v1233
    %1255 = vst [vmem:[#allocation2 + $0x100] sm:$0xff] %v1247
    %v1256 = vld [vmem:[%s0 + $0x4] sm:$0x1]
    %v1257 = vld [vmem:[%s0 + $0xc] sm:$0x1]
    %v1258 = vld [vmem:[%s0 + $0x14] sm:$0x1]
    %v1259 = vld [vmem:[%s0 + $0x1c] sm:$0x1]
    %v1260 = vld [vmem:[%s0 + $0x24] sm:$0x1]
    %v1261 = vld [vmem:[%s0 + $0x2c] sm:$0x1]
    %v1262 = vld [vmem:[%s0 + $0x34] sm:$0x1]
    %v1263 = vld [vmem:[%s0 + $0x3c] sm:$0x1]
    %v1264 = vld [vmem:[%s0 + $0x44] sm:$0x1]
    %v1265 = vld [vmem:[%s0 + $0x4c] sm:$0x1]
    %v1266 = vld [vmem:[%s0 + $0x54] sm:$0x1]
    %v1267 = vld [vmem:[%s0 + $0x5c] sm:$0x1]
    %v1268 = vld [vmem:[%s0 + $0x64] sm:$0x1]
    %v1269 = vld [vmem:[%s0 + $0x6c] sm:$0x1]
    %v1270 = vld [vmem:[%s0 + $0x74] sm:$0x1]
    %v1271 = vld [vmem:[%s0 + $0x7c] sm:$0x1]
    %v1288 = vrot.slane %v1257, 7
    %v1289 = vsel %vm52, %v1288, %v1256
    %v1290 = vrot.slane %v1258, 6
    %v1291 = vsel %vm55, %v1290, %v1289
    %v1292 = vrot.slane %v1259, 5
    %v1293 = vsel %vm58, %v1292, %v1291
    %v1294 = vrot.slane %v1260, 4
    %v1295 = vsel %vm61, %v1294, %v1293
    %v1296 = vrot.slane %v1261, 3
    %v1297 = vsel %vm64, %v1296, %v1295
    %v1298 = vrot.slane %v1262, 2
    %v1299 = vsel %vm67, %v1298, %v1297
    %v1300 = vrot.slane %v1263, 1
    %v1301 = vsel %vm70, %v1300, %v1299
    %v1302 = vrot.slane %v1265, 7
    %v1303 = vsel %vm52, %v1302, %v1264
    %v1304 = vrot.slane %v1266, 6
    %v1305 = vsel %vm55, %v1304, %v1303
    %v1306 = vrot.slane %v1267, 5
    %v1307 = vsel %vm58, %v1306, %v1305
    %v1308 = vrot.slane %v1268, 4
    %v1309 = vsel %vm61, %v1308, %v1307
    %v1310 = vrot.slane %v1269, 3
    %v1311 = vsel %vm64, %v1310, %v1309
    %v1312 = vrot.slane %v1270, 2
    %v1313 = vsel %vm67, %v1312, %v1311
    %v1314 = vrot.slane %v1271, 1
    %v1315 = vsel %vm70, %v1314, %v1313
    %1318 = vadd.xlane.f32.xlu0 %v1301
    %v1319 = vpop.xlane.xlu0 %1318
    %1320 = vadd.xlane.f32.xlu0 %v1315
    %v1321 = vpop.xlane.xlu0 %1320
    %v1322 = vmul.f32 %v1319, 0.009090909
    %v1323 = vmul.f32 %v1321, 0.009090909
    %v1324 = vmul.f32 %v1256, %v1256
    %v1325 = vmul.f32 %v1257, %v1257
    %v1326 = vmul.f32 %v1258, %v1258
    %v1327 = vmul.f32 %v1259, %v1259
    %v1328 = vmul.f32 %v1260, %v1260
    %v1329 = vmul.f32 %v1261, %v1261
    %v1330 = vmul.f32 %v1262, %v1262
    %v1331 = vmul.f32 %v1263, %v1263
    %v1332 = vmul.f32 %v1264, %v1264
    %v1333 = vmul.f32 %v1265, %v1265
    %v1334 = vmul.f32 %v1266, %v1266
    %v1335 = vmul.f32 %v1267, %v1267
    %v1336 = vmul.f32 %v1268, %v1268
    %v1337 = vmul.f32 %v1269, %v1269
    %v1338 = vmul.f32 %v1270, %v1270
    %v1339 = vmul.f32 %v1271, %v1271
    %v1356 = vrot.slane %v1325, 7
    %v1357 = vsel %vm52, %v1356, %v1324
    %v1358 = vrot.slane %v1326, 6
    %v1359 = vsel %vm55, %v1358, %v1357
    %v1360 = vrot.slane %v1327, 5
    %v1361 = vsel %vm58, %v1360, %v1359
    %v1362 = vrot.slane %v1328, 4
    %v1363 = vsel %vm61, %v1362, %v1361
    %v1364 = vrot.slane %v1329, 3
    %v1365 = vsel %vm64, %v1364, %v1363
    %v1366 = vrot.slane %v1330, 2
    %v1367 = vsel %vm67, %v1366, %v1365
    %v1368 = vrot.slane %v1331, 1
    %v1369 = vsel %vm70, %v1368, %v1367
    %v1370 = vrot.slane %v1333, 7
    %v1371 = vsel %vm52, %v1370, %v1332
    %v1372 = vrot.slane %v1334, 6
    %v1373 = vsel %vm55, %v1372, %v1371
    %v1374 = vrot.slane %v1335, 5
    %v1375 = vsel %vm58, %v1374, %v1373
    %v1376 = vrot.slane %v1336, 4
    %v1377 = vsel %vm61, %v1376, %v1375
    %v1378 = vrot.slane %v1337, 3
    %v1379 = vsel %vm64, %v1378, %v1377
    %v1380 = vrot.slane %v1338, 2
    %v1381 = vsel %vm67, %v1380, %v1379
    %v1382 = vrot.slane %v1339, 1
    %v1383 = vsel %vm70, %v1382, %v1381
    %1386 = vadd.xlane.f32.xlu0 %v1369
    %v1387 = vpop.xlane.xlu0 %1386
    %1388 = vadd.xlane.f32.xlu0 %v1383
    %v1389 = vpop.xlane.xlu0 %1388
    %v1390 = vmul.f32 %v1387, 0.009090909
    %v1391 = vmul.f32 %v1389, 0.009090909
    %v1392 = vmul.f32 %v1322, %v1322
    %v1393 = vmul.f32 %v1323, %v1323
    %v1394 = vsub.f32 %v1390, %v1392
    %v1395 = vsub.f32 %v1391, %v1393
    %v1398 = vrot.slane %v1322, 1
    %v1399 = vrot.slane %v1322, 2
    %v1400 = vrot.slane %v1322, 3
    %v1401 = vrot.slane %v1322, 4
    %v1402 = vrot.slane %v1322, 5
    %v1403 = vrot.slane %v1322, 6
    %v1404 = vrot.slane %v1322, 7
    %v1405 = vrot.slane %v1323, 1
    %v1406 = vrot.slane %v1323, 2
    %v1407 = vrot.slane %v1323, 3
    %v1408 = vrot.slane %v1323, 4
    %v1409 = vrot.slane %v1323, 5
    %v1410 = vrot.slane %v1323, 6
    %v1411 = vrot.slane %v1323, 7
    %v1428 = vsub.f32 %v1256, %v1322
    %v1429 = vsub.f32 %v1257, %v1398
    %v1430 = vsub.f32 %v1258, %v1399
    %v1431 = vsub.f32 %v1259, %v1400
    %v1432 = vsub.f32 %v1260, %v1401
    %v1433 = vsub.f32 %v1261, %v1402
    %v1434 = vsub.f32 %v1262, %v1403
    %v1435 = vsub.f32 %v1263, %v1404
    %v1436 = vsub.f32 %v1264, %v1323
    %v1437 = vsub.f32 %v1265, %v1405
    %v1438 = vsub.f32 %v1266, %v1406
    %v1439 = vsub.f32 %v1267, %v1407
    %v1440 = vsub.f32 %v1268, %v1408
    %v1441 = vsub.f32 %v1269, %v1409
    %v1442 = vsub.f32 %v1270, %v1410
    %v1443 = vsub.f32 %v1271, %v1411
    %v1444 = vadd.f32 %v1394, 1e-05
    %v1445 = vadd.f32 %v1395, 1e-05
    %v1446 = vrsqrt.pop %v1444
    %v1447 = vrsqrt.pop %v1445
    %v1450 = vrot.slane %v1446, 1
    %v1451 = vrot.slane %v1446, 2
    %v1452 = vrot.slane %v1446, 3
    %v1453 = vrot.slane %v1446, 4
    %v1454 = vrot.slane %v1446, 5
    %v1455 = vrot.slane %v1446, 6
    %v1456 = vrot.slane %v1446, 7
    %v1457 = vrot.slane %v1447, 1
    %v1458 = vrot.slane %v1447, 2
    %v1459 = vrot.slane %v1447, 3
    %v1460 = vrot.slane %v1447, 4
    %v1461 = vrot.slane %v1447, 5
    %v1462 = vrot.slane %v1447, 6
    %v1463 = vrot.slane %v1447, 7
    %v1480 = vmul.f32 %v1428, %v1446
    %v1481 = vmul.f32 %v1429, %v1450
    %v1482 = vmul.f32 %v1430, %v1451
    %v1483 = vmul.f32 %v1431, %v1452
    %v1484 = vmul.f32 %v1432, %v1453
    %v1485 = vmul.f32 %v1433, %v1454
    %v1486 = vmul.f32 %v1434, %v1455
    %v1487 = vmul.f32 %v1435, %v1456
    %v1488 = vmul.f32 %v1436, %v1447
    %v1489 = vmul.f32 %v1437, %v1457
    %v1490 = vmul.f32 %v1438, %v1458
    %v1491 = vmul.f32 %v1439, %v1459
    %v1492 = vmul.f32 %v1440, %v1460
    %v1493 = vmul.f32 %v1441, %v1461
    %v1494 = vmul.f32 %v1442, %v1462
    %v1495 = vmul.f32 %v1443, %v1463
    %v1496 = vmax.f32 %v1480, 0.0
    %v1497 = vmax.f32 %v1481, 0.0
    %v1498 = vmax.f32 %v1482, 0.0
    %v1499 = vmax.f32 %v1483, 0.0
    %v1500 = vmax.f32 %v1484, 0.0
    %v1501 = vmax.f32 %v1485, 0.0
    %v1502 = vmax.f32 %v1486, 0.0
    %v1503 = vmax.f32 %v1487, 0.0
    %v1504 = vmax.f32 %v1488, 0.0
    %v1505 = vmax.f32 %v1489, 0.0
    %v1506 = vmax.f32 %v1490, 0.0
    %v1507 = vmax.f32 %v1491, 0.0
    %v1508 = vmax.f32 %v1492, 0.0
    %v1509 = vmax.f32 %v1493, 0.0
    %v1510 = vmax.f32 %v1494, 0.0
    %v1511 = vmax.f32 %v1495, 0.0
    %v1528 = vrot.slane %v1497, 7
    %v1529 = vsel %vm52, %v1528, %v1496
    %v1530 = vrot.slane %v1498, 6
    %v1531 = vsel %vm55, %v1530, %v1529
    %v1532 = vrot.slane %v1499, 5
    %v1533 = vsel %vm58, %v1532, %v1531
    %v1534 = vrot.slane %v1500, 4
    %v1535 = vsel %vm61, %v1534, %v1533
    %v1536 = vrot.slane %v1501, 3
    %v1537 = vsel %vm64, %v1536, %v1535
    %v1538 = vrot.slane %v1502, 2
    %v1539 = vsel %vm67, %v1538, %v1537
    %v1540 = vrot.slane %v1503, 1
    %v1541 = vsel %vm70, %v1540, %v1539
    %v1542 = vrot.slane %v1505, 7
    %v1543 = vsel %vm52, %v1542, %v1504
    %v1544 = vrot.slane %v1506, 6
    %v1545 = vsel %vm55, %v1544, %v1543
    %v1546 = vrot.slane %v1507, 5
    %v1547 = vsel %vm58, %v1546, %v1545
    %v1548 = vrot.slane %v1508, 4
    %v1549 = vsel %vm61, %v1548, %v1547
    %v1550 = vrot.slane %v1509, 3
    %v1551 = vsel %vm64, %v1550, %v1549
    %v1552 = vrot.slane %v1510, 2
    %v1553 = vsel %vm67, %v1552, %v1551
    %v1554 = vrot.slane %v1511, 1
    %v1555 = vsel %vm70, %v1554, %v1553
    %1558 = vst [vmem:[#allocation2 + $0x80] sm:$0xff] %v1541
    %1559 = vst [vmem:[#allocation2 + $0xb0] sm:$0xff] %v1555
    %1560 = vst [vmem:[#allocation2 + $0x28] sm:$0xff] %v1541
    %1561 = vst [vmem:[#allocation2 + $0x58] sm:$0xff] %v1555
    %1562 = vst [vmem:[#allocation2 + $0xd8] sm:$0xff] %v1541
    %1563 = vst [vmem:[#allocation2 + $0x108] sm:$0xff] %v1555
    %v1564 = vld [vmem:[%s0 + $0x5] sm:$0x1]
    %v1565 = vld [vmem:[%s0 + $0xd] sm:$0x1]
    %v1566 = vld [vmem:[%s0 + $0x15] sm:$0x1]
    %v1567 = vld [vmem:[%s0 + $0x1d] sm:$0x1]
    %v1568 = vld [vmem:[%s0 + $0x25] sm:$0x1]
    %v1569 = vld [vmem:[%s0 + $0x2d] sm:$0x1]
    %v1570 = vld [vmem:[%s0 + $0x35] sm:$0x1]
    %v1571 = vld [vmem:[%s0 + $0x3d] sm:$0x1]
    %v1572 = vld [vmem:[%s0 + $0x45] sm:$0x1]
    %v1573 = vld [vmem:[%s0 + $0x4d] sm:$0x1]
    %v1574 = vld [vmem:[%s0 + $0x55] sm:$0x1]
    %v1575 = vld [vmem:[%s0 + $0x5d] sm:$0x1]
    %v1576 = vld [vmem:[%s0 + $0x65] sm:$0x1]
    %v1577 = vld [vmem:[%s0 + $0x6d] sm:$0x1]
    %v1578 = vld [vmem:[%s0 + $0x75] sm:$0x1]
    %v1579 = vld [vmem:[%s0 + $0x7d] sm:$0x1]
    %v1596 = vrot.slane %v1565, 7
    %v1597 = vsel %vm52, %v1596, %v1564
    %v1598 = vrot.slane %v1566, 6
    %v1599 = vsel %vm55, %v1598, %v1597
    %v1600 = vrot.slane %v1567, 5
    %v1601 = vsel %vm58, %v1600, %v1599
    %v1602 = vrot.slane %v1568, 4
    %v1603 = vsel %vm61, %v1602, %v1601
    %v1604 = vrot.slane %v1569, 3
    %v1605 = vsel %vm64, %v1604, %v1603
    %v1606 = vrot.slane %v1570, 2
    %v1607 = vsel %vm67, %v1606, %v1605
    %v1608 = vrot.slane %v1571, 1
    %v1609 = vsel %vm70, %v1608, %v1607
    %v1610 = vrot.slane %v1573, 7
    %v1611 = vsel %vm52, %v1610, %v1572
    %v1612 = vrot.slane %v1574, 6
    %v1613 = vsel %vm55, %v1612, %v1611
    %v1614 = vrot.slane %v1575, 5
    %v1615 = vsel %vm58, %v1614, %v1613
    %v1616 = vrot.slane %v1576, 4
    %v1617 = vsel %vm61, %v1616, %v1615
    %v1618 = vrot.slane %v1577, 3
    %v1619 = vsel %vm64, %v1618, %v1617
    %v1620 = vrot.slane %v1578, 2
    %v1621 = vsel %vm67, %v1620, %v1619
    %v1622 = vrot.slane %v1579, 1
    %v1623 = vsel %vm70, %v1622, %v1621
    %1626 = vadd.xlane.f32.xlu0 %v1609
    %v1627 = vpop.xlane.xlu0 %1626
    %1628 = vadd.xlane.f32.xlu0 %v1623
    %v1629 = vpop.xlane.xlu0 %1628
    %v1630 = vmul.f32 %v1627, 0.009090909
    %v1631 = vmul.f32 %v1629, 0.009090909
    %v1632 = vmul.f32 %v1564, %v1564
    %v1633 = vmul.f32 %v1565, %v1565
    %v1634 = vmul.f32 %v1566, %v1566
    %v1635 = vmul.f32 %v1567, %v1567
    %v1636 = vmul.f32 %v1568, %v1568
    %v1637 = vmul.f32 %v1569, %v1569
    %v1638 = vmul.f32 %v1570, %v1570
    %v1639 = vmul.f32 %v1571, %v1571
    %v1640 = vmul.f32 %v1572, %v1572
    %v1641 = vmul.f32 %v1573, %v1573
    %v1642 = vmul.f32 %v1574, %v1574
    %v1643 = vmul.f32 %v1575, %v1575
    %v1644 = vmul.f32 %v1576, %v1576
    %v1645 = vmul.f32 %v1577, %v1577
    %v1646 = vmul.f32 %v1578, %v1578
    %v1647 = vmul.f32 %v1579, %v1579
    %v1664 = vrot.slane %v1633, 7
    %v1665 = vsel %vm52, %v1664, %v1632
    %v1666 = vrot.slane %v1634, 6
    %v1667 = vsel %vm55, %v1666, %v1665
    %v1668 = vrot.slane %v1635, 5
    %v1669 = vsel %vm58, %v1668, %v1667
    %v1670 = vrot.slane %v1636, 4
    %v1671 = vsel %vm61, %v1670, %v1669
    %v1672 = vrot.slane %v1637, 3
    %v1673 = vsel %vm64, %v1672, %v1671
    %v1674 = vrot.slane %v1638, 2
    %v1675 = vsel %vm67, %v1674, %v1673
    %v1676 = vrot.slane %v1639, 1
    %v1677 = vsel %vm70, %v1676, %v1675
    %v1678 = vrot.slane %v1641, 7
    %v1679 = vsel %vm52, %v1678, %v1640
    %v1680 = vrot.slane %v1642, 6
    %v1681 = vsel %vm55, %v1680, %v1679
    %v1682 = vrot.slane %v1643, 5
    %v1683 = vsel %vm58, %v1682, %v1681
    %v1684 = vrot.slane %v1644, 4
    %v1685 = vsel %vm61, %v1684, %v1683
    %v1686 = vrot.slane %v1645, 3
    %v1687 = vsel %vm64, %v1686, %v1685
    %v1688 = vrot.slane %v1646, 2
    %v1689 = vsel %vm67, %v1688, %v1687
    %v1690 = vrot.slane %v1647, 1
    %v1691 = vsel %vm70, %v1690, %v1689
    %1694 = vadd.xlane.f32.xlu0 %v1677
    %v1695 = vpop.xlane.xlu0 %1694
    %1696 = vadd.xlane.f32.xlu0 %v1691
    %v1697 = vpop.xlane.xlu0 %1696
    %v1698 = vmul.f32 %v1695, 0.009090909
    %v1699 = vmul.f32 %v1697, 0.009090909
    %v1700 = vmul.f32 %v1630, %v1630
    %v1701 = vmul.f32 %v1631, %v1631
    %v1702 = vsub.f32 %v1698, %v1700
    %v1703 = vsub.f32 %v1699, %v1701
    %v1706 = vrot.slane %v1630, 1
    %v1707 = vrot.slane %v1630, 2
    %v1708 = vrot.slane %v1630, 3
    %v1709 = vrot.slane %v1630, 4
    %v1710 = vrot.slane %v1630, 5
    %v1711 = vrot.slane %v1630, 6
    %v1712 = vrot.slane %v1630, 7
    %v1713 = vrot.slane %v1631, 1
    %v1714 = vrot.slane %v1631, 2
    %v1715 = vrot.slane %v1631, 3
    %v1716 = vrot.slane %v1631, 4
    %v1717 = vrot.slane %v1631, 5
    %v1718 = vrot.slane %v1631, 6
    %v1719 = vrot.slane %v1631, 7
    %v1736 = vsub.f32 %v1564, %v1630
    %v1737 = vsub.f32 %v1565, %v1706
    %v1738 = vsub.f32 %v1566, %v1707
    %v1739 = vsub.f32 %v1567, %v1708
    %v1740 = vsub.f32 %v1568, %v1709
    %v1741 = vsub.f32 %v1569, %v1710
    %v1742 = vsub.f32 %v1570, %v1711
    %v1743 = vsub.f32 %v1571, %v1712
    %v1744 = vsub.f32 %v1572, %v1631
    %v1745 = vsub.f32 %v1573, %v1713
    %v1746 = vsub.f32 %v1574, %v1714
    %v1747 = vsub.f32 %v1575, %v1715
    %v1748 = vsub.f32 %v1576, %v1716
    %v1749 = vsub.f32 %v1577, %v1717
    %v1750 = vsub.f32 %v1578, %v1718
    %v1751 = vsub.f32 %v1579, %v1719
    %v1752 = vadd.f32 %v1702, 1e-05
    %v1753 = vadd.f32 %v1703, 1e-05
    %v1754 = vrsqrt.pop %v1752
    %v1755 = vrsqrt.pop %v1753
    %v1758 = vrot.slane %v1754, 1
    %v1759 = vrot.slane %v1754, 2
    %v1760 = vrot.slane %v1754, 3
    %v1761 = vrot.slane %v1754, 4
    %v1762 = vrot.slane %v1754, 5
    %v1763 = vrot.slane %v1754, 6
    %v1764 = vrot.slane %v1754, 7
    %v1765 = vrot.slane %v1755, 1
    %v1766 = vrot.slane %v1755, 2
    %v1767 = vrot.slane %v1755, 3
    %v1768 = vrot.slane %v1755, 4
    %v1769 = vrot.slane %v1755, 5
    %v1770 = vrot.slane %v1755, 6
    %v1771 = vrot.slane %v1755, 7
    %v1788 = vmul.f32 %v1736, %v1754
    %v1789 = vmul.f32 %v1737, %v1758
    %v1790 = vmul.f32 %v1738, %v1759
    %v1791 = vmul.f32 %v1739, %v1760
    %v1792 = vmul.f32 %v1740, %v1761
    %v1793 = vmul.f32 %v1741, %v1762
    %v1794 = vmul.f32 %v1742, %v1763
    %v1795 = vmul.f32 %v1743, %v1764
    %v1796 = vmul.f32 %v1744, %v1755
    %v1797 = vmul.f32 %v1745, %v1765
    %v1798 = vmul.f32 %v1746, %v1766
    %v1799 = vmul.f32 %v1747, %v1767
    %v1800 = vmul.f32 %v1748, %v1768
    %v1801 = vmul.f32 %v1749, %v1769
    %v1802 = vmul.f32 %v1750, %v1770
    %v1803 = vmul.f32 %v1751, %v1771
    %v1804 = vmax.f32 %v1788, 0.0
    %v1805 = vmax.f32 %v1789, 0.0
    %v1806 = vmax.f32 %v1790, 0.0
    %v1807 = vmax.f32 %v1791, 0.0
    %v1808 = vmax.f32 %v1792, 0.0
    %v1809 = vmax.f32 %v1793, 0.0
    %v1810 = vmax.f32 %v1794, 0.0
    %v1811 = vmax.f32 %v1795, 0.0
    %v1812 = vmax.f32 %v1796, 0.0
    %v1813 = vmax.f32 %v1797, 0.0
    %v1814 = vmax.f32 %v1798, 0.0
    %v1815 = vmax.f32 %v1799, 0.0
    %v1816 = vmax.f32 %v1800, 0.0
    %v1817 = vmax.f32 %v1801, 0.0
    %v1818 = vmax.f32 %v1802, 0.0
    %v1819 = vmax.f32 %v1803, 0.0
    %v1836 = vrot.slane %v1805, 7
    %v1837 = vsel %vm52, %v1836, %v1804
    %v1838 = vrot.slane %v1806, 6
    %v1839 = vsel %vm55, %v1838, %v1837
    %v1840 = vrot.slane %v1807, 5
    %v1841 = vsel %vm58, %v1840, %v1839
    %v1842 = vrot.slane %v1808, 4
    %v1843 = vsel %vm61, %v1842, %v1841
    %v1844 = vrot.slane %v1809, 3
    %v1845 = vsel %vm64, %v1844, %v1843
    %v1846 = vrot.slane %v1810, 2
    %v1847 = vsel %vm67, %v1846, %v1845
    %v1848 = vrot.slane %v1811, 1
    %v1849 = vsel %vm70, %v1848, %v1847
    %v1850 = vrot.slane %v1813, 7
    %v1851 = vsel %vm52, %v1850, %v1812
    %v1852 = vrot.slane %v1814, 6
    %v1853 = vsel %vm55, %v1852, %v1851
    %v1854 = vrot.slane %v1815, 5
    %v1855 = vsel %vm58, %v1854, %v1853
    %v1856 = vrot.slane %v1816, 4
    %v1857 = vsel %vm61, %v1856, %v1855
    %v1858 = vrot.slane %v1817, 3
    %v1859 = vsel %vm64, %v1858, %v1857
    %v1860 = vrot.slane %v1818, 2
    %v1861 = vsel %vm67, %v1860, %v1859
    %v1862 = vrot.slane %v1819, 1
    %v1863 = vsel %vm70, %v1862, %v1861
    %1866 = vst [vmem:[#allocation2 + $0x88] sm:$0xff] %v1849
    %1867 = vst [vmem:[#allocation2 + $0xb8] sm:$0xff] %v1863
    %1868 = vst [vmem:[#allocation2 + $0xe0] sm:$0xff] %v1849
    %1869 = vst [vmem:[#allocation2 + $0x110] sm:$0xff] %v1863
    %v1870 = vld [vmem:[%s1] sm:$0xff]
    %v1871 = vld [vmem:[%s1 + $0x8] sm:$0xff]
    %v1872 = vld [vmem:[%s1 + $0x10] sm:$0xff]
    %v1873 = vld [vmem:[%s1 + $0x18] sm:$0xff]
    %v1874 = vld [vmem:[#allocation2] sm:$0xff]
    %v1875 = vld [vmem:[#allocation2 + $0x8] sm:$0xff]
    %v1876 = vld [vmem:[#allocation2 + $0x10] sm:$0xff]
    %v1877 = vld [vmem:[#allocation2 + $0x18] sm:$0xff]
    %v1878 = vld [vmem:[#allocation2 + $0x20] sm:$0xff]
    %v1879 = vld [vmem:[#allocation2 + $0x28] sm:$0xff]
    %v1880 = vld [vmem:[#allocation2 + $0x30] sm:$0xff]
    %v1881 = vld [vmem:[#allocation2 + $0x38] sm:$0xff]
    %v1882 = vld [vmem:[#allocation2 + $0x40] sm:$0xff]
    %v1883 = vld [vmem:[#allocation2 + $0x48] sm:$0xff]
    %v1884 = vld [vmem:[#allocation2 + $0x50] sm:$0xff]
    %v1885 = vld [vmem:[#allocation2 + $0x58] sm:$0xff]
    %v1886 = vld [vmem:[#allocation2 + $0x60] sm:$0xff]
    %v1887 = vld [vmem:[#allocation2 + $0x68] sm:$0xff]
    %v1888 = vld [vmem:[#allocation2 + $0x70] sm:$0xff]
    %v1889 = vld [vmem:[#allocation2 + $0x78] sm:$0xff]
    %v1890 = vld [vmem:[#allocation2 + $0x80] sm:$0xff]
    %v1891 = vld [vmem:[#allocation2 + $0x88] sm:$0xff]
    %v1892 = vld [vmem:[#allocation2 + $0x90] sm:$0xff]
    %v1893 = vld [vmem:[#allocation2 + $0x98] sm:$0xff]
    %v1894 = vld [vmem:[#allocation2 + $0xa0] sm:$0xff]
    %v1895 = vld [vmem:[#allocation2 + $0xa8] sm:$0xff]
    %v1896 = vld [vmem:[#allocation2 + $0xb0] sm:$0xff]
    %v1897 = vld [vmem:[#allocation2 + $0xb8] sm:$0xff]
    %v1898 = vld [vmem:[#allocation2 + $0xc0] sm:$0xff]
    %v1899 = vld [vmem:[#allocation2 + $0xc8] sm:$0xff]
    %v1900 = vld [vmem:[#allocation2 + $0xd0] sm:$0xff]
    %v1901 = vld [vmem:[#allocation2 + $0xd8] sm:$0xff]
    %v1902 = vld [vmem:[#allocation2 + $0xe0] sm:$0xff]
    %v1903 = vld [vmem:[#allocation2 + $0xe8] sm:$0xff]
    %v1904 = vld [vmem:[#allocation2 + $0xf0] sm:$0xff]
    %v1905 = vld [vmem:[#allocation2 + $0xf8] sm:$0xff]
    %v1906 = vld [vmem:[#allocation2 + $0x100] sm:$0xff]
    %v1907 = vld [vmem:[#allocation2 + $0x108] sm:$0xff]
    %v1908 = vld [vmem:[#allocation2 + $0x110] sm:$0xff]
    %v1909 = vld [vmem:[#allocation2 + $0x118] sm:$0xff]
    %v1910 = vld [vmem:[%s2] sm:$0xff]
    %v1911 = vld [vmem:[%s2 + $0x8] sm:$0xff]
    %v1912 = vld [vmem:[%s2 + $0x10] sm:$0xff]
    %v1913 = vld [vmem:[%s2 + $0x18] sm:$0xff]
    %1915 = vset.pattern.permute.xlu0 0
    %1916 = vperm.xlu0 %1915, %v1910
    %v1917 = vpop.permute.xlu0 %1916
    %1920 = vset.pattern.permute.xlu0 0
    %1921 = vperm.xlu0 %1920, %v1911
    %v1922 = vpop.permute.xlu0 %1921
    %1925 = vset.pattern.permute.xlu0 0
    %1926 = vperm.xlu0 %1925, %v1912
    %v1927 = vpop.permute.xlu0 %1926
    %1930 = vset.pattern.permute.xlu0 0
    %1931 = vperm.xlu0 %1930, %v1913
    %v1932 = vpop.permute.xlu0 %1931
    %vm1934 = vcmask 392192
    %v1936 = vsel %vm1934, %v1870, 0
    %v1939 = vsel %vm1934, %v1871, 0
    %v1942 = vsel %vm1934, %v1872, 0
    %v1945 = vsel %vm1934, %v1873, 0
    %1947 = vmatprep.subr.mxu0 0.0
    %1948 = vmatpush1.msra.mxu0 0.0
    %1949 = vmatprep.subr.mxu0 0.0
    %1950 = vmatpush1.msra.mxu0 0.0
    %1951 = vmatprep.subr.mxu0 0.0
    %1952 = vmatpush1.msra.mxu0 0.0
    %1953 = vmatprep.subr.mxu0 0.0
    %1954 = vmatpush1.msra.mxu0 0.0
    %1955 = vmatprep.subr.mxu0 0.0
    %1956 = vmatpush1.msra.mxu0 0.0
    %1957 = vmatprep.subr.mxu0 0.0
    %1958 = vmatpush1.msra.mxu0 0.0
    %1959 = vmatprep.subr.mxu0 0.0
    %1960 = vmatpush1.msra.mxu0 0.0
    %1961 = vmatprep.subr.mxu0 0.0
    %1962 = vmatpush1.msra.mxu0 0.0
    %1963 = vmatprep.subr.mxu0 0.0
    %1964 = vmatpush1.msra.mxu0 0.0
    %1965 = vmatprep.subr.mxu0 0.0
    %1966 = vmatpush1.msra.mxu0 0.0
    %1967 = vmatprep.subr.mxu0 %v1905
    %1968 = vmatpush1.msra.mxu0 %v1904
    %1969 = vmatprep.subr.mxu0 %v1899
    %1970 = vmatpush1.msra.mxu0 %v1898
    %1971 = vmatprep.subr.mxu0 %v1893
    %1972 = vmatpush1.msra.mxu0 %v1892
    %1973 = vmatprep.subr.mxu0 %v1887
    %1974 = vmatpush1.msra.mxu0 %v1886
    %1975 = vmatprep.subr.mxu0 %v1881
    %1976 = vmatpush1.msra.mxu0 %v1880
    %1977 = vmatprep.subr.mxu0 %v1875
    %1978 = vmatpush1.msra.mxu0 %v1874
    %1979 = vmatprep.subr.mxu0 0.0
    %1980 = vmatpush2.msra.mxu0 0.0
    %1981 = vmatprep.subr.mxu0 0.0
    %1982 = vmatpush2.msra.mxu0 0.0
    %1983 = vmatprep.subr.mxu0 0.0
    %1984 = vmatpush2.msra.mxu0 0.0
    %1985 = vmatprep.subr.mxu0 0.0
    %1986 = vmatpush2.msra.mxu0 0.0
    %1987 = vmatprep.subr.mxu0 0.0
    %1988 = vmatpush2.msra.mxu0 0.0
    %1989 = vmatprep.subr.mxu0 0.0
    %1990 = vmatpush2.msra.mxu0 0.0
    %1991 = vmatprep.subr.mxu0 0.0
    %1992 = vmatpush2.msra.mxu0 0.0
    %1993 = vmatprep.subr.mxu0 0.0
    %1994 = vmatpush2.msra.mxu0 0.0
    %1995 = vmatprep.subr.mxu0 0.0
    %1996 = vmatpush2.msra.mxu0 0.0
    %1997 = vmatprep.subr.mxu0 0.0
    %1998 = vmatpush2.msra.mxu0 0.0
    %1999 = vmatprep.subr.mxu0 0.0
    %2000 = vmatpush2.msra.mxu0 0.0
    %2001 = vmatprep.subr.mxu0 0.0
    %2002 = vmatpush2.msra.mxu0 0.0
    %2003 = vmatprep.subr.mxu0 0.0
    %2004 = vmatpush2.msra.mxu0 0.0
    %2005 = vmatprep.subr.mxu0 0.0
    %2006 = vmatpush2.msra.mxu0 0.0
    %2007 = vmatprep.subr.mxu0 0.0
    %2008 = vmatpush2.msra.mxu0 0.0
    %2009 = vmatprep.subr.mxu0 0.0
    %2010 = vmatpush2.msra.mxu0 0.0
    %2011 = vmatprep.mubr.f32.mxu0 0.0
    %2012 = vmatmul.mubr.f32.gmra.mxu0 %v1936
    %v2013 = vpop.f32.mrf.mxu0
    %v2014 = vadd.f32 %v1917, %v2013
    %v2015 = vpop.f32.mrf.mxu0
    %v2016 = vadd.f32 %v1917, %v2015
    %2017 = vmatprep.mubr.f32.mxu0 0.0
    %2018 = vmatmul.mubr.f32.gmra.mxu0 %v1939
    %v2019 = vpop.f32.mrf.mxu0
    %v2020 = vadd.f32 %v1922, %v2019
    %v2021 = vpop.f32.mrf.mxu0
    %v2022 = vadd.f32 %v1922, %v2021
    %2023 = vmatprep.mubr.f32.mxu0 0.0
    %2024 = vmatmul.mubr.f32.gmra.mxu0 %v1942
    %v2025 = vpop.f32.mrf.mxu0
    %v2026 = vadd.f32 %v1927, %v2025
    %v2027 = vpop.f32.mrf.mxu0
    %v2028 = vadd.f32 %v1927, %v2027
    %2029 = vmatprep.mubr.f32.mxu0 0.0
    %2030 = vmatmul.mubr.f32.gmra.mxu0 %v1945
    %v2031 = vpop.f32.mrf.mxu0
    %v2032 = vadd.f32 %v1932, %v2031
    %v2033 = vpop.f32.mrf.mxu0
    %v2034 = vadd.f32 %v1932, %v2033
    %2035 = vdwg.mxu0
    %2036 = vmatprep.subr.mxu0 0.0
    %2037 = vmatpush1.msra.mxu0 0.0
    %2038 = vmatprep.subr.mxu0 0.0
    %2039 = vmatpush1.msra.mxu0 0.0
    %2040 = vmatprep.subr.mxu0 0.0
    %2041 = vmatpush1.msra.mxu0 0.0
    %2042 = vmatprep.subr.mxu0 0.0
    %2043 = vmatpush1.msra.mxu0 0.0
    %2044 = vmatprep.subr.mxu0 0.0
    %2045 = vmatpush1.msra.mxu0 0.0
    %2046 = vmatprep.subr.mxu0 0.0
    %2047 = vmatpush1.msra.mxu0 0.0
    %2048 = vmatprep.subr.mxu0 0.0
    %2049 = vmatpush1.msra.mxu0 0.0
    %2050 = vmatprep.subr.mxu0 0.0
    %2051 = vmatpush1.msra.mxu0 0.0
    %2052 = vmatprep.subr.mxu0 0.0
    %2053 = vmatpush1.msra.mxu0 0.0
    %2054 = vmatprep.subr.mxu0 0.0
    %2055 = vmatpush1.msra.mxu0 0.0
    %2056 = vmatprep.subr.mxu0 %v1907
    %2057 = vmatpush1.msra.mxu0 %v1906
    %2058 = vmatprep.subr.mxu0 %v1901
    %2059 = vmatpush1.msra.mxu0 %v1900
    %2060 = vmatprep.subr.mxu0 %v1895
    %2061 = vmatpush1.msra.mxu0 %v1894
    %2062 = vmatprep.subr.mxu0 %v1889
    %2063 = vmatpush1.msra.mxu0 %v1888
    %2064 = vmatprep.subr.mxu0 %v1883
    %2065 = vmatpush1.msra.mxu0 %v1882
    %2066 = vmatprep.subr.mxu0 %v1877
    %2067 = vmatpush1.msra.mxu0 %v1876
    %2068 = vmatprep.subr.mxu0 0.0
    %2069 = vmatpush2.msra.mxu0 0.0
    %2070 = vmatprep.subr.mxu0 0.0
    %2071 = vmatpush2.msra.mxu0 0.0
    %2072 = vmatprep.subr.mxu0 0.0
    %2073 = vmatpush2.msra.mxu0 0.0
    %2074 = vmatprep.subr.mxu0 0.0
    %2075 = vmatpush2.msra.mxu0 0.0
    %2076 = vmatprep.subr.mxu0 0.0
    %2077 = vmatpush2.msra.mxu0 0.0
    %2078 = vmatprep.subr.mxu0 0.0
    %2079 = vmatpush2.msra.mxu0 0.0
    %2080 = vmatprep.subr.mxu0 0.0
    %2081 = vmatpush2.msra.mxu0 0.0
    %2082 = vmatprep.subr.mxu0 0.0
    %2083 = vmatpush2.msra.mxu0 0.0
    %2084 = vmatprep.subr.mxu0 0.0
    %2085 = vmatpush2.msra.mxu0 0.0
    %2086 = vmatprep.subr.mxu0 0.0
    %2087 = vmatpush2.msra.mxu0 0.0
    %2088 = vmatprep.subr.mxu0 0.0
    %2089 = vmatpush2.msra.mxu0 0.0
    %2090 = vmatprep.subr.mxu0 0.0
    %2091 = vmatpush2.msra.mxu0 0.0
    %2092 = vmatprep.subr.mxu0 0.0
    %2093 = vmatpush2.msra.mxu0 0.0
    %2094 = vmatprep.subr.mxu0 0.0
    %2095 = vmatpush2.msra.mxu0 0.0
    %2096 = vmatprep.subr.mxu0 0.0
    %2097 = vmatpush2.msra.mxu0 0.0
    %2098 = vmatprep.subr.mxu0 0.0
    %2099 = vmatpush2.msra.mxu0 0.0
    %2100 = vmatprep.mubr.f32.mxu0 0.0
    %2101 = vmatmul.mubr.f32.gmra.mxu0 %v1936
    %v2102 = vpop.f32.mrf.mxu0
    %v2103 = vadd.f32 %v1917, %v2102
    %v2104 = vpop.f32.mrf.mxu0
    %v2105 = vadd.f32 %v1917, %v2104
    %2106 = vmatprep.mubr.f32.mxu0 0.0
    %2107 = vmatmul.mubr.f32.gmra.mxu0 %v1939
    %v2108 = vpop.f32.mrf.mxu0
    %v2109 = vadd.f32 %v1922, %v2108
    %v2110 = vpop.f32.mrf.mxu0
    %v2111 = vadd.f32 %v1922, %v2110
    %2112 = vmatprep.mubr.f32.mxu0 0.0
    %2113 = vmatmul.mubr.f32.gmra.mxu0 %v1942
    %v2114 = vpop.f32.mrf.mxu0
    %v2115 = vadd.f32 %v1927, %v2114
    %v2116 = vpop.f32.mrf.mxu0
    %v2117 = vadd.f32 %v1927, %v2116
    %2118 = vmatprep.mubr.f32.mxu0 0.0
    %2119 = vmatmul.mubr.f32.gmra.mxu0 %v1945
    %v2120 = vpop.f32.mrf.mxu0
    %v2121 = vadd.f32 %v1932, %v2120
    %v2122 = vpop.f32.mrf.mxu0
    %v2123 = vadd.f32 %v1932, %v2122
    %2124 = vdwg.mxu0
    %2125 = vmatprep.subr.mxu0 0.0
    %2126 = vmatpush1.msra.mxu0 0.0
    %2127 = vmatprep.subr.mxu0 0.0
    %2128 = vmatpush1.msra.mxu0 0.0
    %2129 = vmatprep.subr.mxu0 0.0
    %2130 = vmatpush1.msra.mxu0 0.0
    %2131 = vmatprep.subr.mxu0 0.0
    %2132 = vmatpush1.msra.mxu0 0.0
    %2133 = vmatprep.subr.mxu0 0.0
    %2134 = vmatpush1.msra.mxu0 0.0
    %2135 = vmatprep.subr.mxu0 0.0
    %2136 = vmatpush1.msra.mxu0 0.0
    %2137 = vmatprep.subr.mxu0 0.0
    %2138 = vmatpush1.msra.mxu0 0.0
    %2139 = vmatprep.subr.mxu0 0.0
    %2140 = vmatpush1.msra.mxu0 0.0
    %2141 = vmatprep.subr.mxu0 0.0
    %2142 = vmatpush1.msra.mxu0 0.0
    %2143 = vmatprep.subr.mxu0 0.0
    %2144 = vmatpush1.msra.mxu0 0.0
    %2145 = vmatprep.subr.mxu0 %v1909
    %2146 = vmatpush1.msra.mxu0 %v1908
    %2147 = vmatprep.subr.mxu0 %v1903
    %2148 = vmatpush1.msra.mxu0 %v1902
    %2149 = vmatprep.subr.mxu0 %v1897
    %2150 = vmatpush1.msra.mxu0 %v1896
    %2151 = vmatprep.subr.mxu0 %v1891
    %2152 = vmatpush1.msra.mxu0 %v1890
    %2153 = vmatprep.subr.mxu0 %v1885
    %2154 = vmatpush1.msra.mxu0 %v1884
    %2155 = vmatprep.subr.mxu0 %v1879
    %2156 = vmatpush1.msra.mxu0 %v1878
    %2157 = vmatprep.subr.mxu0 0.0
    %2158 = vmatpush2.msra.mxu0 0.0
    %2159 = vmatprep.subr.mxu0 0.0
    %2160 = vmatpush2.msra.mxu0 0.0
    %2161 = vmatprep.subr.mxu0 0.0
    %2162 = vmatpush2.msra.mxu0 0.0
    %2163 = vmatprep.subr.mxu0 0.0
    %2164 = vmatpush2.msra.mxu0 0.0
    %2165 = vmatprep.subr.mxu0 0.0
    %2166 = vmatpush2.msra.mxu0 0.0
    %2167 = vmatprep.subr.mxu0 0.0
    %2168 = vmatpush2.msra.mxu0 0.0
    %2169 = vmatprep.subr.mxu0 0.0
    %2170 = vmatpush2.msra.mxu0 0.0
    %2171 = vmatprep.subr.mxu0 0.0
    %2172 = vmatpush2.msra.mxu0 0.0
    %2173 = vmatprep.subr.mxu0 0.0
    %2174 = vmatpush2.msra.mxu0 0.0
    %2175 = vmatprep.subr.mxu0 0.0
    %2176 = vmatpush2.msra.mxu0 0.0
    %2177 = vmatprep.subr.mxu0 0.0
    %2178 = vmatpush2.msra.mxu0 0.0
    %2179 = vmatprep.subr.mxu0 0.0
    %2180 = vmatpush2.msra.mxu0 0.0
    %2181 = vmatprep.subr.mxu0 0.0
    %2182 = vmatpush2.msra.mxu0 0.0
    %2183 = vmatprep.subr.mxu0 0.0
    %2184 = vmatpush2.msra.mxu0 0.0
    %2185 = vmatprep.subr.mxu0 0.0
    %2186 = vmatpush2.msra.mxu0 0.0
    %2187 = vmatprep.subr.mxu0 0.0
    %2188 = vmatpush2.msra.mxu0 0.0
    %2189 = vmatprep.mubr.f32.mxu0 0.0
    %2190 = vmatmul.mubr.f32.gmra.mxu0 %v1936
    %v2191 = vpop.f32.mrf.mxu0
    %v2192 = vadd.f32 %v1917, %v2191
    %v2193 = vpop.f32.mrf.mxu0
    %v2194 = vadd.f32 %v1917, %v2193
    %2195 = vmatprep.mubr.f32.mxu0 0.0
    %2196 = vmatmul.mubr.f32.gmra.mxu0 %v1939
    %v2197 = vpop.f32.mrf.mxu0
    %v2198 = vadd.f32 %v1922, %v2197
    %v2199 = vpop.f32.mrf.mxu0
    %v2200 = vadd.f32 %v1922, %v2199
    %2201 = vmatprep.mubr.f32.mxu0 0.0
    %2202 = vmatmul.mubr.f32.gmra.mxu0 %v1942
    %v2203 = vpop.f32.mrf.mxu0
    %v2204 = vadd.f32 %v1927, %v2203
    %v2205 = vpop.f32.mrf.mxu0
    %v2206 = vadd.f32 %v1927, %v2205
    %2207 = vmatprep.mubr.f32.mxu0 0.0
    %2208 = vmatmul.mubr.f32.gmra.mxu0 %v1945
    %v2209 = vpop.f32.mrf.mxu0
    %v2210 = vadd.f32 %v1932, %v2209
    %v2211 = vpop.f32.mrf.mxu0
    %v2212 = vadd.f32 %v1932, %v2211
    %2213 = vdwg.mxu0
    %2214 = vst [vmem:[#allocation3] sm:$0xff] %v2014
    %2215 = vst [vmem:[#allocation3 + $0x8] sm:$0xff] %v2016
    %2216 = vst [vmem:[#allocation3 + $0x10] sm:$0xff] %v2103
    %2217 = vst [vmem:[#allocation3 + $0x18] sm:$0xff] %v2105
    %2218 = vst [vmem:[#allocation3 + $0x20] sm:$0xff] %v2192
    %2219 = vst [vmem:[#allocation3 + $0x28] sm:$0xff] %v2194
    %2220 = vst [vmem:[#allocation3 + $0x30] sm:$0xff] %v2020
    %2221 = vst [vmem:[#allocation3 + $0x38] sm:$0xff] %v2022
    %2222 = vst [vmem:[#allocation3 + $0x40] sm:$0xff] %v2109
    %2223 = vst [vmem:[#allocation3 + $0x48] sm:$0xff] %v2111
    %2224 = vst [vmem:[#allocation3 + $0x50] sm:$0xff] %v2198
    %2225 = vst [vmem:[#allocation3 + $0x58] sm:$0xff] %v2200
    %2226 = vst [vmem:[#allocation3 + $0x60] sm:$0xff] %v2026
    %2227 = vst [vmem:[#allocation3 + $0x68] sm:$0xff] %v2028
    %2228 = vst [vmem:[#allocation3 + $0x70] sm:$0xff] %v2115
    %2229 = vst [vmem:[#allocation3 + $0x78] sm:$0xff] %v2117
    %2230 = vst [vmem:[#allocation3 + $0x80] sm:$0xff] %v2204
    %2231 = vst [vmem:[#allocation3 + $0x88] sm:$0xff] %v2206
    %2232 = vst [vmem:[#allocation3 + $0x90] sm:$0xff] %v2032
    %2233 = vst [vmem:[#allocation3 + $0x98] sm:$0xff] %v2034
    %2234 = vst [vmem:[#allocation3 + $0xa0] sm:$0xff] %v2121
    %2235 = vst [vmem:[#allocation3 + $0xa8] sm:$0xff] %v2123
    %2236 = vst [vmem:[#allocation3 + $0xb0] sm:$0xff] %v2210
    %2237 = vst [vmem:[#allocation3 + $0xb8] sm:$0xff] %v2212
    // Predicated region
    $region14: #{tpu_custom_call.1} parent=1 // pred_check
      _
    $region15: #{tpu_custom_call.1} parent=1 // pred_check_branch
      %2239 = sbr.rel (0) target = $region17
    $region16: #{tpu_custom_call.1} parent=1 // pred_region
      %s2241 = ssub.s32 3072, 3072
      %2242 = vsyncadd [#allocation4], %s2241
      %s2243 = sshll.u32 [#allocation3], 4
      %s2244 = int_to_ptr.vmem [resolvable:$true] %s2243
      %2249 = dma.vmem_to_hbm [thread:$0]  %s2244, 3072, %s3, [#allocation4], 768, 768, 48
    $region17: #{tpu_custom_call.1} parent=1 // pred_fallthru
      _
    // Predicated region
    $region18: #{tpu_custom_call.1} parent=1 // pred_check
      _
    $region19: #{tpu_custom_call.1} parent=1 // pred_check_branch
      %2251 = sbr.rel (0) target = $region21
    $region20: #{tpu_custom_call.1} parent=1 // pred_region
      %2252 = dma.done [#allocation4], 3072
    $region21: #{tpu_custom_call.1} parent=1 // pred_fallthru
      _
    %2253 = vsyncpa [#allocation4], 1

</llo_original>
